<compile_context>
chip_gen: v6e
topology: v6e:2x2x1
jax: 0.10.0
libtpu: 0.0.40
codegen_flags: <defaults>
</compile_context>

<pallas_src>
import functools
import math

import jax
import jax.numpy as jnp
from jax.experimental import pallas as pl
from jax.experimental.pallas import tpu as pltpu

LANE = 128
NEG_BIG = -1e30  # masks padded class columns out of the log-softmax


# --------------------------------------------------------------------------------------
# Kernel
# --------------------------------------------------------------------------------------
def _sage_layer_kernel(a_ref, xk_ref, xs_ref, dinv_ref, wl_ref, wr_ref, b_ref,
                       out_ref, acc_ref, *, mode):
    """One SAGEConv layer, one (row tile, K tile) grid step.

    a_ref   : (tile_n, tile_k)       int8  edge-count slab of the adjacency
    xk_ref  : (tile_k, F_in_pad)     bf16  neighbor features for this K tile
    xs_ref  : (tile_n, F_in_pad)     bf16  self features for this row tile
    dinv_ref: (tile_n, 1)            f32   1/deg for this row tile (exact mean scale)
    wl_ref  : (F_in_pad, F_out_pad)  bf16  lin_l weight (pre-transposed, zero-padded)
    wr_ref  : (F_in_pad, F_out_pad)  bf16  lin_r weight (pre-transposed, zero-padded)
    b_ref   : (1, F_out_pad)         f32   lin_l bias (padded cols: 0 or NEG_BIG)
    out_ref : (tile_n, F_out_pad)    bf16 / f32
    acc_ref : (tile_n, F_in_pad)     f32   scratch accumulator over K tiles
    """
    k = pl.program_id(1)

    @pl.when(k == 0)
    def _():
        acc_ref[...] = jnp.zeros_like(acc_ref)

    # Partial aggregation: upcast int8 slab (VPU, hidden under the DMA), MXU matmul, f32 acc.
    a_bf = a_ref[...].astype(jnp.float32).astype(jnp.bfloat16)  # exact for small counts
    acc_ref[...] += jnp.dot(a_bf, xk_ref[...], preferred_element_type=jnp.float32)

    @pl.when(k == pl.num_programs(1) - 1)
    def _():
        agg = acc_ref[...] * dinv_ref[...]  # exact f32 mean (no bf16 1/deg quantization)
        y = (jnp.dot(agg.astype(jnp.bfloat16), wl_ref[...],
                     preferred_element_type=jnp.float32)
             + jnp.dot(xs_ref[...], wr_ref[...],
                       preferred_element_type=jnp.float32)
             + b_ref[...])
        if mode == "relu":
            out_ref[...] = jnp.maximum(y, 0.0).astype(out_ref.dtype)
        else:  # log_softmax over classes; padded columns carry NEG_BIG bias -> exp == 0
            m = jnp.max(y, axis=1, keepdims=True)
            z = y - m
            lse = jnp.log(jnp.sum(jnp.exp(z), axis=1, keepdims=True))
            out_ref[...] = (z - lse).astype(out_ref.dtype)


def _sage_layer(a_i8, x, deg_inv, w_l, w_r, bias, *, tile_n, tile_k, mode, out_dtype):
    n_pad = a_i8.shape[0]
    f_in_pad = x.shape[1]
    f_out_pad = w_l.shape[1]
    grid = (n_pad // tile_n, n_pad // tile_k)

    out_itemsize = jnp.dtype(out_dtype).itemsize
    cost = pl.CostEstimate(
        flops=int(2 * n_pad * n_pad * f_in_pad + 4 * n_pad * f_in_pad * f_out_pad),
        transcendentals=int(n_pad * f_out_pad if mode == "log_softmax" else 0),
        bytes_accessed=int(n_pad * n_pad                       # int8 adjacency
                           + grid[0] * n_pad * f_in_pad * 2    # neighbor features (re-streamed)
                           + n_pad * f_in_pad * 2              # self features
                           + n_pad * f_out_pad * out_itemsize))

    kernel = functools.partial(_sage_layer_kernel, mode=mode)
    return pl.pallas_call(
        kernel,
        out_shape=jax.ShapeDtypeStruct((n_pad, f_out_pad), out_dtype),
        grid=grid,
        in_specs=[
            pl.BlockSpec((tile_n, tile_k), lambda i, k: (i, k)),       # A slab (int8, pipelined)
            pl.BlockSpec((tile_k, f_in_pad), lambda i, k: (k, 0)),     # neighbor features
            pl.BlockSpec((tile_n, f_in_pad), lambda i, k: (i, 0)),     # self features
            pl.BlockSpec((tile_n, 1), lambda i, k: (i, 0)),            # 1/deg (f32)
            pl.BlockSpec((f_in_pad, f_out_pad), lambda i, k: (0, 0)),  # W_l (resident)
            pl.BlockSpec((f_in_pad, f_out_pad), lambda i, k: (0, 0)),  # W_r (resident)
            pl.BlockSpec((1, f_out_pad), lambda i, k: (0, 0)),         # bias (resident)
        ],
        out_specs=pl.BlockSpec((tile_n, f_out_pad), lambda i, k: (i, 0)),
        scratch_shapes=[pltpu.VMEM((tile_n, f_in_pad), jnp.float32)],
        compiler_params=pltpu.CompilerParams(
            dimension_semantics=("parallel", "arbitrary"),
            vmem_limit_bytes=48 * 1024 * 1024),
        cost_estimate=cost,
    )(a_i8, x, x, deg_inv, w_l, w_r, bias)


# --------------------------------------------------------------------------------------
# Wrapper-side layout plumbing (padding, pre-transpose, int8 adjacency + f32 deg_inv)
# --------------------------------------------------------------------------------------
def _round_up(v, m):
    return ((v + m - 1) // m) * m


def prepare_graph(edge_index, num_nodes, n_pad):
    """Dense int8 edge counts (exact) plus f32 1/deg, both padded to n_pad."""
    src, dst = edge_index[0], edge_index[1]
    counts = jnp.zeros((num_nodes, num_nodes), jnp.float32).at[dst, src].add(1.0)
    deg = jnp.clip(jnp.sum(counts, axis=1, keepdims=True), 1.0, None)
    # Assumes per-pair edge multiplicity < 128 so int8 holds the exact count.
    a_i8 = jnp.zeros((n_pad, n_pad), jnp.int8).at[:num_nodes, :num_nodes].set(
        counts.astype(jnp.int8))
    dinv = jnp.ones((n_pad, 1), jnp.float32).at[:num_nodes].set(1.0 / deg)
    return a_i8, dinv


def prepare_features(x, n_pad, feat_pad):
    n, f = x.shape
    return jnp.zeros((n_pad, feat_pad), jnp.float32).at[:n, :f].set(x).astype(jnp.bfloat16)


def prepare_params(params, feat_pad, hidden_pad, class_pad):
    """PyTorch-layout (out,in) weights -> pre-transposed, zero-padded, bf16."""
    w1l, w1r, b1, w2l, w2r, b2 = params
    hidden, classes = w1l.shape[0], w2l.shape[0]

    def pad_t(w, in_pad, out_pad):
        return (jnp.zeros((in_pad, out_pad), jnp.float32)
                .at[:w.shape[1], :w.shape[0]].set(w.T).astype(jnp.bfloat16))

    w1l_p = pad_t(w1l, feat_pad, hidden_pad)
    w1r_p = pad_t(w1r, feat_pad, hidden_pad)
    w2l_p = pad_t(w2l, hidden_pad, class_pad)
    w2r_p = pad_t(w2r, hidden_pad, class_pad)
    b1p = jnp.zeros((1, hidden_pad), jnp.float32).at[:, :hidden].set(b1)
    b2p = jnp.full((1, class_pad), NEG_BIG, jnp.float32).at[:, :classes].set(b2)
    return w1l_p, w1r_p, b1p, w2l_p, w2r_p, b2p


def graphsage_forward(x, edge_index, params, *, tile_n=256, tile_k=256,
                      feat_pad=LANE, hidden_pad=LANE, class_pad=LANE):
    assert tile_n % 128 == 0 and tile_k % 128 == 0, "tiles must be multiples of 128"
    n = x.shape[0]
    num_classes = params[3].shape[0]
    n_pad = _round_up(n, math.lcm(tile_n, tile_k))

    a_i8, dinv = prepare_graph(edge_index, n, n_pad)
    xp = prepare_features(x, n_pad, feat_pad)
    w1l, w1r, b1p, w2l, w2r, b2p = prepare_params(params, feat_pad, hidden_pad, class_pad)

    # Layer 1 (+ReLU); kept bf16 since it feeds layer 2's MXU aggregation.
    h1 = _sage_layer(a_i8, xp, dinv, w1l, w1r, b1p,
                     tile_n=tile_n, tile_k=tile_k, mode="relu", out_dtype=jnp.bfloat16)
    # Layer 2 (+log_softmax); f32 log-probs, lane-dense (128) then sliced to C.
    outp = _sage_layer(a_i8, h1, dinv, w2l, w2r, b2p,
                       tile_n=tile_n, tile_k=tile_k, mode="log_softmax",
                       out_dtype=jnp.float32)
    return outp[:n, :num_classes]


# --------------------------------------------------------------------------------------
# Parameter construction and pure-JAX reference
# --------------------------------------------------------------------------------------
def init_params(key, in_channels, hidden_channels, num_classes):
    k = jax.random.split(key, 6)

    def lin(kk, out_dim, in_dim):
        bound = 1.0 / jnp.sqrt(jnp.float32(in_dim))
        return jax.random.uniform(kk, (out_dim, in_dim), jnp.float32, -bound, bound)

    w1l = lin(k[0], hidden_channels, in_channels)     # conv1.lin_l.weight
    w1r = lin(k[1], hidden_channels, in_channels)     # conv1.lin_r.weight (no bias)
    b1 = jax.random.uniform(k[2], (1, hidden_channels), jnp.float32,
                            -1.0 / jnp.sqrt(jnp.float32(in_channels)),
                            1.0 / jnp.sqrt(jnp.float32(in_channels)))
    w2l = lin(k[3], num_classes, hidden_channels)     # conv2.lin_l.weight
    w2r = lin(k[4], num_classes, hidden_channels)     # conv2.lin_r.weight (no bias)
    b2 = jax.random.uniform(k[5], (1, num_classes), jnp.float32,
                            -1.0 / jnp.sqrt(jnp.float32(hidden_channels)),
                            1.0 / jnp.sqrt(jnp.float32(hidden_channels)))
    return (w1l, w1r, b1, w2l, w2r, b2)


def reference_forward(x, adj_mean, w1l, w1r, b1, w2l, w2r, b2):
    agg1 = adj_mean @ x
    h1 = jnp.maximum(agg1 @ w1l.T + x @ w1r.T + b1, 0.0)
    agg2 = adj_mean @ h1
    logits = agg2 @ w2l.T + h1 @ w2r.T + b2
    return jax.nn.log_softmax(logits, axis=1)


if __name__ == "__main__":
    # Small synthetic graph: N nodes, bidirectional ring + random chords.
    # N=512 with tile_n=tile_k=256 -> grid (2, 2): exercises both the parallel row axis
    # and the "arbitrary" K-accumulation axis.
    N = 512
    in_channels = 16
    hidden_channels = 32
    num_classes = 8

    key = jax.random.PRNGKey(0)
    kx, kp, ke = jax.random.split(key, 3)

    x = jax.random.normal(kx, (N, in_channels), jnp.float32)

    idx = jnp.arange(N)
    ring_src = jnp.concatenate([idx, (idx + 1) % N])
    ring_dst = jnp.concatenate([(idx + 1) % N, idx])
    chord_src = jax.random.randint(ke, (128,), 0, N)
    chord_dst = (chord_src + N // 2) % N
    edge_index = jnp.stack([jnp.concatenate([ring_src, chord_src]),
                            jnp.concatenate([ring_dst, chord_dst])]).astype(jnp.int32)

    params = init_params(kp, in_channels, hidden_channels, num_classes)

    out = graphsage_forward(x, edge_index, params, tile_n=256, tile_k=256)
    out = jax.block_until_ready(out)

    assert out.shape == (N, num_classes)
    # rows of log_softmax exponentiate/sum to 1
    assert bool(jnp.all(jnp.abs(jnp.sum(jnp.exp(out), axis=1) - 1.0) < 1e-3))

    # matches the pure-JAX f32 reference within bf16 matmul tolerance
    src, dst = edge_index[0], edge_index[1]
    counts = jnp.zeros((N, N), jnp.float32).at[dst, src].add(1.0)
    deg = jnp.clip(jnp.sum(counts, axis=1, keepdims=True), 1.0, None)
    adj_mean = counts / deg
    ref = reference_forward(x, adj_mean, *params)
    max_err = float(jnp.max(jnp.abs(out - ref)))
    assert max_err < 0.1, f"max abs err vs reference: {max_err}"
    print("KERNEL_OK")
</pallas_src>

<mosaic_0001>
module attributes {stable_mosaic.version = 11 : i64} {
  func.func @_sage_layer_kernel(%arg0: i32, %arg1: i32, %arg2: memref<256x256xi8, #tpu.memory_space<vmem>>, %arg3: memref<256x128xbf16, #tpu.memory_space<vmem>>, %arg4: memref<256x128xbf16, #tpu.memory_space<vmem>>, %arg5: memref<256x1xf32, #tpu.memory_space<vmem>>, %arg6: memref<128x128xbf16, #tpu.memory_space<vmem>>, %arg7: memref<128x128xbf16, #tpu.memory_space<vmem>>, %arg8: memref<1x128xf32, #tpu.memory_space<vmem>>, %arg9: memref<256x128xbf16, #tpu.memory_space<vmem>>, %arg10: memref<256x128xf32, #tpu.memory_space<vmem>>) attributes {dimension_semantics = [#tpu.dimension_semantics<parallel>, #tpu.dimension_semantics<arbitrary>], iteration_bounds = array<i64: 2, 2>, scalar_prefetch = 0 : i64, scratch_operands = 1 : i64, tpu.core_type = #tpu.core_type<tc>, window_params = [{transform_indices = @transform_0, window_bounds = array<i64: 256, 256>}, {transform_indices = @transform_1, window_bounds = array<i64: 256, 128>}, {transform_indices = @transform_2, window_bounds = array<i64: 256, 128>}, {transform_indices = @transform_3, window_bounds = array<i64: 256, 1>}, {pipeline_mode = #tpu.pipeline_mode<synchronous>, transform_indices = @transform_4, window_bounds = array<i64: 128, 128>}, {pipeline_mode = #tpu.pipeline_mode<synchronous>, transform_indices = @transform_5, window_bounds = array<i64: 128, 128>}, {pipeline_mode = #tpu.pipeline_mode<synchronous>, transform_indices = @transform_6, window_bounds = array<i64: 1, 128>}, {transform_indices = @transform_7, window_bounds = array<i64: 256, 128>}]} {
    %c0_i32 = arith.constant 0 : i32
    %0 = arith.cmpi eq, %arg1, %c0_i32 : i32
    %1 = arith.extui %0 : i1 to i32
    %c0_i32_0 = arith.constant 0 : i32
    %2 = arith.cmpi ne, %1, %c0_i32_0 : i32
    scf.if %2 {
      %cst_9 = arith.constant 0.000000e+00 : f32
      %14 = vector.broadcast %cst_9 : f32 to vector<256x128xf32>
      %c0_10 = arith.constant 0 : index
      %c0_11 = arith.constant 0 : index
      %15 = vector.load %arg10[%c0_10, %c0_11] : memref<256x128xf32, #tpu.memory_space<vmem>>, vector<256x128xf32>
      tpu.vector_store %arg10[%c0_10, %c0_11], %14 {strides = array<i32>} : memref<256x128xf32, #tpu.memory_space<vmem>>, vector<256x128xf32>,
    } else {
    }
    %c0 = arith.constant 0 : index
    %c0_1 = arith.constant 0 : index
    %3 = vector.load %arg2[%c0, %c0_1] : memref<256x256xi8, #tpu.memory_space<vmem>>, vector<256x256xi8>
    %4 = arith.sitofp %3 : vector<256x256xi8> to vector<256x256xf32>
    %5 = arith.truncf %4 : vector<256x256xf32> to vector<256x256xbf16>
    %c0_2 = arith.constant 0 : index
    %c0_3 = arith.constant 0 : index
    %6 = vector.load %arg10[%c0_2, %c0_3] : memref<256x128xf32, #tpu.memory_space<vmem>>, vector<256x128xf32>
    %c0_4 = arith.constant 0 : index
    %c0_5 = arith.constant 0 : index
    %7 = vector.load %arg3[%c0_4, %c0_5] : memref<256x128xbf16, #tpu.memory_space<vmem>>, vector<256x128xbf16>
    %cst = arith.constant dense<0.000000e+00> : vector<256x128xf32>
    %8 = tpu.matmul %5, %7, %cst {dimension_numbers = #tpu.dot_dimension_numbers<[1], [0], [0], [1], [0, 0, 1, 1], [], []>} : vector<256x256xbf16>, vector<256x128xbf16>, vector<256x128xf32> -> vector<256x128xf32>
    %9 = arith.addf %6, %8 : vector<256x128xf32>
    %c0_6 = arith.constant 0 : index
    %c0_7 = arith.constant 0 : index
    %10 = vector.load %arg10[%c0_6, %c0_7] : memref<256x128xf32, #tpu.memory_space<vmem>>, vector<256x128xf32>
    tpu.vector_store %arg10[%c0_6, %c0_7], %9 {strides = array<i32>} : memref<256x128xf32, #tpu.memory_space<vmem>>, vector<256x128xf32>,
    %c1_i32 = arith.constant 1 : i32
    %11 = arith.cmpi eq, %arg1, %c1_i32 : i32
    %12 = arith.extui %11 : i1 to i32
    %c0_i32_8 = arith.constant 0 : i32
    %13 = arith.cmpi ne, %12, %c0_i32_8 : i32
    scf.if %13 {
      %c0_9 = arith.constant 0 : index
      %c0_10 = arith.constant 0 : index
      %14 = vector.load %arg10[%c0_9, %c0_10] : memref<256x128xf32, #tpu.memory_space<vmem>>, vector<256x128xf32>
      %c0_11 = arith.constant 0 : index
      %c0_12 = arith.constant 0 : index
      %15 = vector.load %arg5[%c0_11, %c0_12] : memref<256x1xf32, #tpu.memory_space<vmem>>, vector<256x1xf32>
      %16 = vector.broadcast %15 : vector<256x1xf32> to vector<256x128xf32>
      %17 = arith.mulf %14, %16 : vector<256x128xf32>
      %18 = arith.truncf %17 : vector<256x128xf32> to vector<256x128xbf16>
      %c0_13 = arith.constant 0 : index
      %c0_14 = arith.constant 0 : index
      %19 = vector.load %arg6[%c0_13, %c0_14] : memref<128x128xbf16, #tpu.memory_space<vmem>>, vector<128x128xbf16>
      %cst_15 = arith.constant dense<0.000000e+00> : vector<256x128xf32>
      %20 = tpu.matmul %18, %19, %cst_15 {dimension_numbers = #tpu.dot_dimension_numbers<[1], [0], [0], [1], [0, 0, 1, 1], [], []>} : vector<256x128xbf16>, vector<128x128xbf16>, vector<256x128xf32> -> vector<256x128xf32>
      %c0_16 = arith.constant 0 : index
      %c0_17 = arith.constant 0 : index
      %21 = vector.load %arg4[%c0_16, %c0_17] : memref<256x128xbf16, #tpu.memory_space<vmem>>, vector<256x128xbf16>
      %c0_18 = arith.constant 0 : index
      %c0_19 = arith.constant 0 : index
      %22 = vector.load %arg7[%c0_18, %c0_19] : memref<128x128xbf16, #tpu.memory_space<vmem>>, vector<128x128xbf16>
      %cst_20 = arith.constant dense<0.000000e+00> : vector<256x128xf32>
      %23 = tpu.matmul %21, %22, %cst_20 {dimension_numbers = #tpu.dot_dimension_numbers<[1], [0], [0], [1], [0, 0, 1, 1], [], []>} : vector<256x128xbf16>, vector<128x128xbf16>, vector<256x128xf32> -> vector<256x128xf32>
      %24 = arith.addf %20, %23 : vector<256x128xf32>
      %c0_21 = arith.constant 0 : index
      %c0_22 = arith.constant 0 : index
      %25 = vector.load %arg8[%c0_21, %c0_22] : memref<1x128xf32, #tpu.memory_space<vmem>>, vector<1x128xf32>
      %26 = vector.broadcast %25 : vector<1x128xf32> to vector<256x128xf32>
      %27 = arith.addf %24, %26 : vector<256x128xf32>
      %cst_23 = arith.constant 0.000000e+00 : f32
      %28 = vector.broadcast %cst_23 : f32 to vector<256x128xf32>
      %29 = arith.maximumf %27, %28 : vector<256x128xf32>
      %30 = arith.truncf %29 : vector<256x128xf32> to vector<256x128xbf16>
      %c0_24 = arith.constant 0 : index
      %c0_25 = arith.constant 0 : index
      %31 = vector.load %arg9[%c0_24, %c0_25] : memref<256x128xbf16, #tpu.memory_space<vmem>>, vector<256x128xbf16>
      tpu.vector_store %arg9[%c0_24, %c0_25], %30 {strides = array<i32>} : memref<256x128xbf16, #tpu.memory_space<vmem>>, vector<256x128xbf16>,
    } else {
    }
    return
  }
  func.func @transform_0(%arg0: i32, %arg1: i32) -> (i32, i32) {
    %c0_i32 = arith.constant 0 : i32
    return %arg0, %arg1 : i32, i32
  }
  func.func @transform_1(%arg0: i32, %arg1: i32) -> (i32, i32) {
    %c0_i32 = arith.constant 0 : i32
    %c0_i32_0 = arith.constant 0 : i32
    return %arg1, %c0_i32 : i32, i32
  }
  func.func @transform_2(%arg0: i32, %arg1: i32) -> (i32, i32) {
    %c0_i32 = arith.constant 0 : i32
    %c0_i32_0 = arith.constant 0 : i32
    return %arg0, %c0_i32 : i32, i32
  }
  func.func @transform_3(%arg0: i32, %arg1: i32) -> (i32, i32) {
    %c0_i32 = arith.constant 0 : i32
    %c0_i32_0 = arith.constant 0 : i32
    return %arg0, %c0_i32 : i32, i32
  }
  func.func @transform_4(%arg0: i32, %arg1: i32) -> (i32, i32) {
    %c0_i32 = arith.constant 0 : i32
    %c0_i32_0 = arith.constant 0 : i32
    %c0_i32_1 = arith.constant 0 : i32
    return %c0_i32, %c0_i32_0 : i32, i32
  }
  func.func @transform_5(%arg0: i32, %arg1: i32) -> (i32, i32) {
    %c0_i32 = arith.constant 0 : i32
    %c0_i32_0 = arith.constant 0 : i32
    %c0_i32_1 = arith.constant 0 : i32
    return %c0_i32, %c0_i32_0 : i32, i32
  }
  func.func @transform_6(%arg0: i32, %arg1: i32) -> (i32, i32) {
    %c0_i32 = arith.constant 0 : i32
    %c0_i32_0 = arith.constant 0 : i32
    %c0_i32_1 = arith.constant 0 : i32
    return %c0_i32, %c0_i32_0 : i32, i32
  }
  func.func @transform_7(%arg0: i32, %arg1: i32) -> (i32, i32) {
    %c0_i32 = arith.constant 0 : i32
    %c0_i32_0 = arith.constant 0 : i32
    return %arg0, %c0_i32 : i32, i32
  }
}

</mosaic_0001>

<llo_original>
// kernel: tpu_custom_call.1
$region0: #{tpu_custom_call.1}
  #allocation0 [shape = 'u32[]', space=smem, size = 0x4, offset = 0x4, fixed_abs, tag = 'smem constant byte address 0x4 - core index']
  #allocation1 [shape = 'u32[144,128]{1,0:T(1,128)}', space=vmem, size = 0x12000, scoped, tag = 'internal scratch']
  #allocation2 [shape = 'f32[256,128]{1,0:T(8,128)}', space=vmem, size = 0x20000, scoped, tag = 'scratch operand']
  %s0 = inlined_call_operand.vmem [shape: s8[512,512], index: 0, kind: input, shape index: {}]
  %s1 = inlined_call_operand.hbm [shape: bf16[512,128], index: 1, kind: input, shape index: {}]
  %s2 = inlined_call_operand.hbm [shape: bf16[512,128], index: 2, kind: input, shape index: {}]
  %s3 = inlined_call_operand.vmem [shape: f32[512,1], index: 3, kind: input, shape index: {}]
  %s4 = inlined_call_operand.hbm [shape: bf16[128,128], index: 4, kind: input, shape index: {}]
  %s5 = inlined_call_operand.hbm [shape: bf16[128,128], index: 5, kind: input, shape index: {}]
  %s6 = inlined_call_operand.vmem [shape: f32[1,128], index: 6, kind: input, shape index: {}]
  %s7 = inlined_call_operand.hbm [shape: bf16[512,128], index: 7, kind: output, shape index: {}]
  %s8 = sld [smem:[#allocation0]]
  $region108: #{tpu_custom_call.1} parent=0
    _
  %s10 = ssub.s32 1, %s8
  %s11 = scalar_select 0, %s10, %s8
  $region1: #{tpu_custom_call.1} parent=0
    #allocation3 [shape = 'u8[131072]{0}', space=vmem, size = 0x20000, scoped, tag = 'input window, operand 0']
    #allocation4 [shape = 'u8[131072]{0}', space=vmem, size = 0x20000, scoped, tag = 'input window, operand 1']
    #allocation5 [shape = 's32[2]{0}', space=sflag, size = 0x8, scoped, tag = 'scoped memory for tpu_custom_call.1']
    #allocation6 [shape = 's32[2]{0}', space=sflag, size = 0x8, scoped, tag = 'scoped memory for tpu_custom_call.1']
    #allocation7 [shape = 'u8[131072]{0}', space=vmem, size = 0x20000, scoped, tag = 'input window, operand 2']
    #allocation8 [shape = 's32[2]{0}', space=sflag, size = 0x8, scoped, tag = 'scoped memory for tpu_custom_call.1']
    #allocation9 [shape = 'u8[32768]{0}', space=vmem, size = 0x8000, scoped, tag = 'input window, operand 4, single buffered']
    #allocation10 [shape = 'u8[32768]{0}', space=vmem, size = 0x8000, scoped, tag = 'input window, operand 5, single buffered']
    #allocation11 [shape = 's32[1]{0}', space=sflag, size = 0x4, scoped, tag = 'scoped memory for tpu_custom_call.1']
    #allocation12 [shape = 'u8[131072]{0}', space=vmem, size = 0x20000, scoped, tag = 'output window, operand 0']
    %12 = vsyncpa [#allocation5], 0
    %s13 = scalar_lea.sflag [#allocation5], 1
    %14 = vsyncpa %s13, 0
    %15 = vsyncpa [#allocation8], 0
    %s16 = scalar_lea.sflag [#allocation8], 1
    %17 = vsyncpa %s16, 0
    %18 = vsyncpa [#allocation11], 0
    %19 = vsyncpa [#allocation6], 0
    %s20 = scalar_lea.sflag [#allocation6], 1
    %21 = vsyncpa %s20, 0
    loop: start=0, step=1, limit=6
    $region2: #{tpu_custom_call.1} parent=1 // loop_pre_header
      _
    $region3: #{tpu_custom_call.1} parent=1 // loop_header
      %s23 = sphi 0, %s27
      %p24 = scmp.ge.s32.totalorder %s23, 6
      %s30 = sphi 0, %s42
      %s31 = sphi 0, %s38
      %s32 = sphi 0, %s30
      %s33 = sphi 0, %s31
      %s34 = sphi 0, %s32
      %s35 = sphi 0, %s33
      %s47 = sphi 0, %s49
      %s50 = sphi 0, %s47
      %s51 = sphi 0, %s50
      %s67 = sphi 0, %s51
      %s73 = sphi 0, %s75
      %s76 = sphi 0, %s73
      %s77 = sphi 0, %s76
      %s93 = sphi 0, %s77
      %s99 = sphi 0, %s101
      %s102 = sphi 0, %s99
      %s103 = sphi 0, %s102
      %s119 = sphi 0, %s103
      %s125 = sphi 0, %s127
      %s128 = sphi 0, %s125
      %s129 = sphi 0, %s128
      %s145 = sphi 0, %s129
      %s149 = sphi 0, %s149
      %s151 = sphi 0, %s149
      %s152 = sphi 0, %s151
      %s166 = sphi 0, %s152
      %s170 = sphi 0, %s170
      %s172 = sphi 0, %s170
      %s173 = sphi 0, %s172
      %s187 = sphi 0, %s173
      %s191 = sphi 0, %s191
      %s193 = sphi 0, %s191
      %s194 = sphi 0, %s193
      %s208 = sphi 0, %s194
      %s214 = sphi 0, %s216
      %s217 = sphi 0, %s214
      %s218 = sphi 0, %s217
      %s234 = sphi 0, %s218
    $region4: #{tpu_custom_call.1} parent=1 // loop_header_branch
      %26 = sbr.rel (%p24) target = $region8
    $region5: #{tpu_custom_call.1} parent=1 // loop_body
      %s28 = ssub.s32 %s23, 1
      %s29 = ssub.s32 %s23, 2
      %s36 = sadd.s32 1, %s31
      %p37 = scmp.ge.s32.totalorder %s36, 2
      %s38 = scalar_select %p37, 0, %s36
      %s39 = sadd.s32 1, %s30
      %s40 = scalar_select %p37, %s39, %s30
      %p41 = scmp.ge.s32.totalorder %s40, 2
      %s42 = scalar_select %p41, 0, %s40
      %s43 = ssub.s32 %s30, %s42
      %s44 = ssub.s32 %s31, %s38
      %s45 = sor.u32 %s43, %s44
      %p46 = scmp.eq.s32.totalorder %s45, 0
      %s48 = sadd.s32 %s47, 1
      %s49 = scalar_select %p46, %s47, %s48
      %p52 = pneg %p46
      %p53 = scmp.eq.s32.totalorder %s23, 3
      %p54 = por %p52, %p53
      %p55 = scmp.ne.s32.totalorder %s47, %s50
      %p56 = scmp.eq.s32.totalorder %s23, 0
      %p57 = por %p55, %p56
      %p58 = scmp.ne.s32.totalorder %s47, %s50
      %p59 = scmp.eq.s32.totalorder %s28, 3
      %p60 = por %p58, %p59
      %p61 = scmp.ne.s32.totalorder %s50, %s51
      %p62 = scmp.eq.s32.totalorder %s28, 0
      %p63 = por %p61, %p62
      %p64 = scmp.ne.s32.totalorder %s50, %s51
      %p65 = scmp.eq.s32.totalorder %s29, 3
      %p66 = por %p64, %p65
      %p68 = scmp.ne.s32.totalorder %s51, %s67
      %p69 = scmp.eq.s32.totalorder %s29, 0
      %p70 = por %p68, %p69
      %s71 = ssub.s32 %s31, %s38
      %p72 = scmp.eq.s32.totalorder %s71, 0
      %s74 = sadd.s32 %s73, 1
      %s75 = scalar_select %p72, %s73, %s74
      %p78 = pneg %p72
      %p79 = scmp.eq.s32.totalorder %s23, 3
      %p80 = por %p78, %p79
      %p81 = scmp.ne.s32.totalorder %s73, %s76
      %p82 = scmp.eq.s32.totalorder %s23, 0
      %p83 = por %p81, %p82
      %p84 = scmp.ne.s32.totalorder %s73, %s76
      %p85 = scmp.eq.s32.totalorder %s28, 3
      %p86 = por %p84, %p85
      %p87 = scmp.ne.s32.totalorder %s76, %s77
      %p88 = scmp.eq.s32.totalorder %s28, 0
      %p89 = por %p87, %p88
      %p90 = scmp.ne.s32.totalorder %s76, %s77
      %p91 = scmp.eq.s32.totalorder %s29, 3
      %p92 = por %p90, %p91
      %p94 = scmp.ne.s32.totalorder %s77, %s93
      %p95 = scmp.eq.s32.totalorder %s29, 0
      %p96 = por %p94, %p95
      %s97 = ssub.s32 %s30, %s42
      %p98 = scmp.eq.s32.totalorder %s97, 0
      %s100 = sadd.s32 %s99, 1
      %s101 = scalar_select %p98, %s99, %s100
      %p104 = pneg %p98
      %p105 = scmp.eq.s32.totalorder %s23, 3
      %p106 = por %p104, %p105
      %p107 = scmp.ne.s32.totalorder %s99, %s102
      %p108 = scmp.eq.s32.totalorder %s23, 0
      %p109 = por %p107, %p108
      %p110 = scmp.ne.s32.totalorder %s99, %s102
      %p111 = scmp.eq.s32.totalorder %s28, 3
      %p112 = por %p110, %p111
      %p113 = scmp.ne.s32.totalorder %s102, %s103
      %p114 = scmp.eq.s32.totalorder %s28, 0
      %p115 = por %p113, %p114
      %p116 = scmp.ne.s32.totalorder %s102, %s103
      %p117 = scmp.eq.s32.totalorder %s29, 3
      %p118 = por %p116, %p117
      %p120 = scmp.ne.s32.totalorder %s103, %s119
      %p121 = scmp.eq.s32.totalorder %s29, 0
      %p122 = por %p120, %p121
      %s123 = ssub.s32 %s30, %s42
      %p124 = scmp.eq.s32.totalorder %s123, 0
      %s126 = sadd.s32 %s125, 1
      %s127 = scalar_select %p124, %s125, %s126
      %p130 = pneg %p124
      %p131 = scmp.eq.s32.totalorder %s23, 3
      %p132 = por %p130, %p131
      %p133 = scmp.ne.s32.totalorder %s125, %s128
      %p134 = scmp.eq.s32.totalorder %s23, 0
      %p135 = por %p133, %p134
      %p136 = scmp.ne.s32.totalorder %s125, %s128
      %p137 = scmp.eq.s32.totalorder %s28, 3
      %p138 = por %p136, %p137
      %p139 = scmp.ne.s32.totalorder %s128, %s129
      %p140 = scmp.eq.s32.totalorder %s28, 0
      %p141 = por %p139, %p140
      %p142 = scmp.ne.s32.totalorder %s128, %s129
      %p143 = scmp.eq.s32.totalorder %s29, 3
      %p144 = por %p142, %p143
      %p146 = scmp.ne.s32.totalorder %s129, %s145
      %p147 = scmp.eq.s32.totalorder %s29, 0
      %p148 = por %p146, %p147
      %s150 = sadd.s32 %s149, 1
      %p153 = scmp.eq.s32.totalorder %s23, 3
      %p154 = scmp.ne.s32.totalorder %s149, %s151
      %p155 = scmp.eq.s32.totalorder %s23, 0
      %p156 = por %p154, %p155
      %p157 = scmp.ne.s32.totalorder %s149, %s151
      %p158 = scmp.eq.s32.totalorder %s28, 3
      %p159 = por %p157, %p158
      %p160 = scmp.ne.s32.totalorder %s151, %s152
      %p161 = scmp.eq.s32.totalorder %s28, 0
      %p162 = por %p160, %p161
      %p163 = scmp.ne.s32.totalorder %s151, %s152
      %p164 = scmp.eq.s32.totalorder %s29, 3
      %p165 = por %p163, %p164
      %p167 = scmp.ne.s32.totalorder %s152, %s166
      %p168 = scmp.eq.s32.totalorder %s29, 0
      %p169 = por %p167, %p168
      %s171 = sadd.s32 %s170, 1
      %p174 = scmp.eq.s32.totalorder %s23, 3
      %p175 = scmp.ne.s32.totalorder %s170, %s172
      %p176 = scmp.eq.s32.totalorder %s23, 0
      %p177 = por %p175, %p176
      %p178 = scmp.ne.s32.totalorder %s170, %s172
      %p179 = scmp.eq.s32.totalorder %s28, 3
      %p180 = por %p178, %p179
      %p181 = scmp.ne.s32.totalorder %s172, %s173
      %p182 = scmp.eq.s32.totalorder %s28, 0
      %p183 = por %p181, %p182
      %p184 = scmp.ne.s32.totalorder %s172, %s173
      %p185 = scmp.eq.s32.totalorder %s29, 3
      %p186 = por %p184, %p185
      %p188 = scmp.ne.s32.totalorder %s173, %s187
      %p189 = scmp.eq.s32.totalorder %s29, 0
      %p190 = por %p188, %p189
      %s192 = sadd.s32 %s191, 1
      %p195 = scmp.eq.s32.totalorder %s23, 3
      %p196 = scmp.ne.s32.totalorder %s191, %s193
      %p197 = scmp.eq.s32.totalorder %s23, 0
      %p198 = por %p196, %p197
      %p199 = scmp.ne.s32.totalorder %s191, %s193
      %p200 = scmp.eq.s32.totalorder %s28, 3
      %p201 = por %p199, %p200
      %p202 = scmp.ne.s32.totalorder %s193, %s194
      %p203 = scmp.eq.s32.totalorder %s28, 0
      %p204 = por %p202, %p203
      %p205 = scmp.ne.s32.totalorder %s193, %s194
      %p206 = scmp.eq.s32.totalorder %s29, 3
      %p207 = por %p205, %p206
      %p209 = scmp.ne.s32.totalorder %s194, %s208
      %p210 = scmp.eq.s32.totalorder %s29, 0
      %p211 = por %p209, %p210
      %s212 = ssub.s32 %s30, %s42
      %p213 = scmp.eq.s32.totalorder %s212, 0
      %s215 = sadd.s32 %s214, 1
      %s216 = scalar_select %p213, %s214, %s215
      %p219 = pneg %p213
      %p220 = scmp.eq.s32.totalorder %s23, 3
      %p221 = por %p219, %p220
      %p222 = scmp.ne.s32.totalorder %s214, %s217
      %p223 = scmp.eq.s32.totalorder %s23, 0
      %p224 = por %p222, %p223
      %p225 = scmp.ne.s32.totalorder %s214, %s217
      %p226 = scmp.eq.s32.totalorder %s28, 3
      %p227 = por %p225, %p226
      %p228 = scmp.ne.s32.totalorder %s217, %s218
      %p229 = scmp.eq.s32.totalorder %s28, 0
      %p230 = por %p228, %p229
      %p231 = scmp.ne.s32.totalorder %s217, %s218
      %p232 = scmp.eq.s32.totalorder %s29, 3
      %p233 = por %p231, %p232
      %p235 = scmp.ne.s32.totalorder %s218, %s234
      %p236 = scmp.eq.s32.totalorder %s29, 0
      %p237 = por %p235, %p236
      %p238 = scmp.le.s32.totalorder 1, %s23
      %p239 = scmp.lt.s32.totalorder %s23, 5
      %p240 = pnand %p238, %p239
      %p241 = pneg %p240
      // Predicated region
      $region9: #{tpu_custom_call.1} parent=5 // pred_check
        _
      $region10: #{tpu_custom_call.1} parent=5 // pred_check_branch
        %243 = sbr.rel (%p240) target = $region12
      $region11: #{tpu_custom_call.1} parent=5 // pred_region
        %s244 = ssub.s32 %s23, 1
        // Predicated region
        $region13: #{tpu_custom_call.1} parent=11 // pred_check
          %p245 = pneg %p162
        $region14: #{tpu_custom_call.1} parent=11 // pred_check_branch
          %247 = sbr.rel (%p245) target = $region16
        $region15: #{tpu_custom_call.1} parent=11 // pred_region
          %s249 = ssub.s32 1024, 1024
          %250 = vsyncadd [#allocation8], %s249
          %s251 = sshll.u32 [#allocation9], 4
          %s252 = int_to_ptr.vmem [resolvable:$true] %s251
          %257 = dma.hbm_to_vmem [thread:$0]  %s4, 1024, %s252, [#allocation8], 64, 64, 4
        $region16: #{tpu_custom_call.1} parent=11 // pred_fallthru
          _
        // Predicated region
        $region17: #{tpu_custom_call.1} parent=11 // pred_check
          %p258 = pneg %p183
        $region18: #{tpu_custom_call.1} parent=11 // pred_check_branch
          %260 = sbr.rel (%p258) target = $region20
        $region19: #{tpu_custom_call.1} parent=11 // pred_region
          %s262 = ssub.s32 1024, 1024
          %263 = vsyncadd [#allocation11], %s262
          %s264 = sshll.u32 [#allocation10], 4
          %s265 = int_to_ptr.vmem [resolvable:$true] %s264
          %270 = dma.hbm_to_vmem [thread:$0]  %s5, 1024, %s265, [#allocation11], 64, 64, 4
        $region20: #{tpu_custom_call.1} parent=11 // pred_fallthru
          _
        // Predicated region
        $region21: #{tpu_custom_call.1} parent=11 // pred_check
          %p271 = pneg %p204
        $region22: #{tpu_custom_call.1} parent=11 // pred_check_branch
          %273 = sbr.rel (%p271) target = $region24
        $region23: #{tpu_custom_call.1} parent=11 // pred_region
          _
        $region24: #{tpu_custom_call.1} parent=11 // pred_fallthru
          _
      $region12: #{tpu_custom_call.1} parent=5 // pred_fallthru
        _
      %p274 = scmp.lt.s32.totalorder %s23, 4
      // Predicated region
      $region25: #{tpu_custom_call.1} parent=5 // pred_check
        %p275 = pneg %p274
      $region26: #{tpu_custom_call.1} parent=5 // pred_check_branch
        %277 = sbr.rel (%p275) target = $region28
      $region27: #{tpu_custom_call.1} parent=5 // pred_region
        // Predicated region
        $region29: #{tpu_custom_call.1} parent=27 // pred_check
          %p278 = pneg %p57
        $region30: #{tpu_custom_call.1} parent=27 // pred_check_branch
          %280 = sbr.rel (%p278) target = $region32
        $region31: #{tpu_custom_call.1} parent=27 // pred_region
          %s281 = sand.u32 %s47, 1
          %s282 = sand.u32 %s47, 1
          %s283 = smul.addr %s282, 128
          %s284 = scalar_lea.vmem [#allocation3], %s283
          %s285 = smul.u32 8, %s30
          %s286 = smul.u32 2, %s31
          %s287 = smul.addr %s285, 4
          %s288 = sadd.s32 %s286, %s287
          %s289 = smul.addr %s288, 8
          %s290 = scalar_lea.vmem %s0, %s289
          // Predicated region
          $region33: #{tpu_custom_call.1} parent=31 // pred_check
            _
          $region34: #{tpu_custom_call.1} parent=31 // pred_check_branch
            %292 = sbr.rel (0) target = $region36
          $region35: #{tpu_custom_call.1} parent=31 // pred_region
            // Predicated region
            $region37: #{tpu_custom_call.1} parent=35 // pred_check
              _
            $region38: #{tpu_custom_call.1} parent=35 // pred_check_branch
              %294 = sbr.rel (0) target = $region40
            $region39: #{tpu_custom_call.1} parent=35 // pred_region
              loop: start=0, step=1, limit=1
              $region41: #{tpu_custom_call.1} parent=39 // loop_pre_header
                _
              $region42: #{tpu_custom_call.1} parent=39 // loop_header
                %s296 = sphi 0, %s300
                %p297 = scmp.ge.s32.totalorder %s296, 1
                %s301 = sphi %s290, %s290
                %s302 = sphi %s284, %s284
              $region43: #{tpu_custom_call.1} parent=39 // loop_header_branch
                %299 = sbr.rel (%p297) target = $region47
              $region44: #{tpu_custom_call.1} parent=39 // loop_body
                %v303 = vld [vmem:[%s301] sm:$0xff]
                %304 = vst [vmem:[%s302] sm:$0xff] %v303
                %v305 = vld [vmem:[%s301 + $0x8] sm:$0xff]
                %306 = vst [vmem:[%s302 + $0x8] sm:$0xff] %v305
                %v307 = vld [vmem:[%s301 + $0x20] sm:$0xff]
                %308 = vst [vmem:[%s302 + $0x10] sm:$0xff] %v307
                %v309 = vld [vmem:[%s301 + $0x28] sm:$0xff]
                %310 = vst [vmem:[%s302 + $0x18] sm:$0xff] %v309
                %v311 = vld [vmem:[%s301 + $0x40] sm:$0xff]
                %312 = vst [vmem:[%s302 + $0x20] sm:$0xff] %v311
                %v313 = vld [vmem:[%s301 + $0x48] sm:$0xff]
                %314 = vst [vmem:[%s302 + $0x28] sm:$0xff] %v313
                %v315 = vld [vmem:[%s301 + $0x60] sm:$0xff]
                %316 = vst [vmem:[%s302 + $0x30] sm:$0xff] %v315
                %v317 = vld [vmem:[%s301 + $0x68] sm:$0xff]
                %318 = vst [vmem:[%s302 + $0x38] sm:$0xff] %v317
                %v319 = vld [vmem:[%s301 + $0x80] sm:$0xff]
                %320 = vst [vmem:[%s302 + $0x40] sm:$0xff] %v319
                %v321 = vld [vmem:[%s301 + $0x88] sm:$0xff]
                %322 = vst [vmem:[%s302 + $0x48] sm:$0xff] %v321
                %v323 = vld [vmem:[%s301 + $0xa0] sm:$0xff]
                %324 = vst [vmem:[%s302 + $0x50] sm:$0xff] %v323
                %v325 = vld [vmem:[%s301 + $0xa8] sm:$0xff]
                %326 = vst [vmem:[%s302 + $0x58] sm:$0xff] %v325
                %v327 = vld [vmem:[%s301 + $0xc0] sm:$0xff]
                %328 = vst [vmem:[%s302 + $0x60] sm:$0xff] %v327
                %v329 = vld [vmem:[%s301 + $0xc8] sm:$0xff]
                %330 = vst [vmem:[%s302 + $0x68] sm:$0xff] %v329
                %v331 = vld [vmem:[%s301 + $0xe0] sm:$0xff]
                %332 = vst [vmem:[%s302 + $0x70] sm:$0xff] %v331
                %v333 = vld [vmem:[%s301 + $0xe8] sm:$0xff]
                %334 = vst [vmem:[%s302 + $0x78] sm:$0xff] %v333
              $region45: #{tpu_custom_call.1} parent=39 // loop_footer
                %s300 = sadd.s32 1, %s296
              $region46: #{tpu_custom_call.1} parent=39 // loop_footer_branch
                %295 = sbr.rel target = $region42
              $region47: #{tpu_custom_call.1} parent=39 // loop_exit
                _
            $region40: #{tpu_custom_call.1} parent=35 // pred_fallthru
              _
            // Predicated region
            $region48: #{tpu_custom_call.1} parent=35 // pred_check
              _
            $region49: #{tpu_custom_call.1} parent=35 // pred_check_branch
              %336 = sbr.rel target = $region51
            $region50: #{tpu_custom_call.1} parent=35 // pred_region
              _
            $region51: #{tpu_custom_call.1} parent=35 // pred_fallthru
              _
          $region36: #{tpu_custom_call.1} parent=31 // pred_fallthru
            _
          %337 = vnop
        $region32: #{tpu_custom_call.1} parent=27 // pred_fallthru
          _
        // Predicated region
        $region52: #{tpu_custom_call.1} parent=27 // pred_check
          %p338 = pneg %p83
        $region53: #{tpu_custom_call.1} parent=27 // pred_check_branch
          %340 = sbr.rel (%p338) target = $region55
        $region54: #{tpu_custom_call.1} parent=27 // pred_region
          %s341 = sand.u32 %s73, 1
          %s342 = scalar_lea.sflag [#allocation5], %s341
          %s343 = sand.u32 %s73, 1
          %s344 = smul.addr %s343, 128
          %s345 = scalar_lea.vmem [#allocation4], %s344
          %s346 = smul.u32 32, %s31
          %s348 = ssub.s32 2048, 2048
          %349 = vsyncadd %s342, %s348
          %s350 = smul.addr %s346, 64
          %s351 = scalar_lea.hbm %s1, %s350
          %s352 = sshll.u32 %s345, 4
          %s353 = int_to_ptr.vmem [resolvable:$true] %s352
          %358 = dma.hbm_to_vmem [thread:$0]  %s351, 2048, %s353, %s342, 64, 64, 4
        $region55: #{tpu_custom_call.1} parent=27 // pred_fallthru
          _
        // Predicated region
        $region56: #{tpu_custom_call.1} parent=27 // pred_check
          %p359 = pneg %p109
        $region57: #{tpu_custom_call.1} parent=27 // pred_check_branch
          %361 = sbr.rel (%p359) target = $region59
        $region58: #{tpu_custom_call.1} parent=27 // pred_region
          %s362 = sand.u32 %s23, 1
          %s363 = scalar_lea.sflag [#allocation8], %s362
          %s364 = sand.u32 %s99, 1
          %s365 = smul.addr %s364, 128
          %s366 = scalar_lea.vmem [#allocation7], %s365
          %s367 = smul.u32 32, %s30
          %s369 = ssub.s32 2048, 2048
          %370 = vsyncadd %s363, %s369
          %s371 = smul.addr %s367, 64
          %s372 = scalar_lea.hbm %s2, %s371
          %s373 = sshll.u32 %s366, 4
          %s374 = int_to_ptr.vmem [resolvable:$true] %s373
          %379 = dma.hbm_to_vmem [thread:$0]  %s372, 2048, %s374, %s363, 64, 64, 4
        $region59: #{tpu_custom_call.1} parent=27 // pred_fallthru
          _
        // Predicated region
        $region60: #{tpu_custom_call.1} parent=27 // pred_check
          %p380 = pneg %p135
        $region61: #{tpu_custom_call.1} parent=27 // pred_check_branch
          %382 = sbr.rel (%p380) target = $region63
        $region62: #{tpu_custom_call.1} parent=27 // pred_region
          %s383 = smul.u32 32, %s30
          %p384 = scmp.lt.s32.totalorder %s383, 63
          %s385 = scalar_select %p384, %s383, 63
          %s386 = smul.addr %s385, 8
          %s387 = scalar_lea.vmem %s3, %s386
          %s388 = smul.u32 32, %s30
        $region63: #{tpu_custom_call.1} parent=27 // pred_fallthru
          _
      $region28: #{tpu_custom_call.1} parent=5 // pred_fallthru
        _
      %p389 = scmp.le.s32.totalorder 1, %s23
      %p390 = scmp.lt.s32.totalorder %s23, 5
      %p391 = pnand %p389, %p390
      %p392 = pneg %p391
      // Predicated region
      $region64: #{tpu_custom_call.1} parent=5 // pred_check
        _
      $region65: #{tpu_custom_call.1} parent=5 // pred_check_branch
        %394 = sbr.rel (%p391) target = $region67
      $region66: #{tpu_custom_call.1} parent=5 // pred_region
        %s395 = ssub.s32 %s23, 1
        %s396 = sand.u32 %s50, 1
        %s397 = sand.u32 %s50, 1
        %s398 = smul.addr %s397, 128
        %s399 = scalar_lea.vmem [#allocation3], %s398
        // Predicated region
        $region68: #{tpu_custom_call.1} parent=66 // pred_check
          %p400 = pneg %p63
        $region69: #{tpu_custom_call.1} parent=66 // pred_check_branch
          %402 = sbr.rel (%p400) target = $region71
        $region70: #{tpu_custom_call.1} parent=66 // pred_region
          _
        $region71: #{tpu_custom_call.1} parent=66 // pred_fallthru
          _
        %s403 = sand.u32 %s76, 1
        %s404 = scalar_lea.sflag [#allocation5], %s403
        %s405 = sand.u32 %s76, 1
        %s406 = smul.addr %s405, 128
        %s407 = scalar_lea.vmem [#allocation4], %s406
        // Predicated region
        $region72: #{tpu_custom_call.1} parent=66 // pred_check
          %p408 = pneg %p89
        $region73: #{tpu_custom_call.1} parent=66 // pred_check_branch
          %410 = sbr.rel (%p408) target = $region75
        $region74: #{tpu_custom_call.1} parent=66 // pred_region
          %411 = dma.done %s404, 2048
        $region75: #{tpu_custom_call.1} parent=66 // pred_fallthru
          _
        %s412 = sand.u32 %s28, 1
        %s413 = scalar_lea.sflag [#allocation8], %s412
        %s414 = sand.u32 %s102, 1
        %s415 = smul.addr %s414, 128
        %s416 = scalar_lea.vmem [#allocation7], %s415
        // Predicated region
        $region76: #{tpu_custom_call.1} parent=66 // pred_check
          %p417 = pneg %p115
        $region77: #{tpu_custom_call.1} parent=66 // pred_check_branch
          %419 = sbr.rel (%p417) target = $region79
        $region78: #{tpu_custom_call.1} parent=66 // pred_region
          %420 = dma.done %s413, 2048
        $region79: #{tpu_custom_call.1} parent=66 // pred_fallthru
          _
        // Predicated region
        $region80: #{tpu_custom_call.1} parent=66 // pred_check
          %p421 = pneg %p162
        $region81: #{tpu_custom_call.1} parent=66 // pred_check_branch
          %423 = sbr.rel (%p421) target = $region83
        $region82: #{tpu_custom_call.1} parent=66 // pred_region
          %424 = dma.done [#allocation8], 1024
        $region83: #{tpu_custom_call.1} parent=66 // pred_fallthru
          _
        // Predicated region
        $region84: #{tpu_custom_call.1} parent=66 // pred_check
          %p425 = pneg %p183
        $region85: #{tpu_custom_call.1} parent=66 // pred_check_branch
          %427 = sbr.rel (%p425) target = $region87
        $region86: #{tpu_custom_call.1} parent=66 // pred_region
          %428 = dma.done [#allocation11], 1024
        $region87: #{tpu_custom_call.1} parent=66 // pred_fallthru
          _
        %s429 = sand.u32 %s50, 1
        %s430 = sand.u32 %s50, 1
        %s431 = smul.addr %s430, 128
        %s432 = scalar_lea.vmem [#allocation3], %s431
        %p433 = pneg %p63
        %p434 = pneg %p60
        %s435 = sand.u32 %s76, 1
        %s436 = scalar_lea.sflag [#allocation5], %s435
        %s437 = sand.u32 %s76, 1
        %s438 = smul.addr %s437, 128
        %s439 = scalar_lea.vmem [#allocation4], %s438
        %p440 = pneg %p89
        %p441 = pneg %p86
        %s442 = sand.u32 %s28, 1
        %s443 = scalar_lea.sflag [#allocation8], %s442
        %s444 = sand.u32 %s102, 1
        %s445 = smul.addr %s444, 128
        %s446 = scalar_lea.vmem [#allocation7], %s445
        %p447 = pneg %p115
        %p448 = pneg %p112
        %s449 = smul.u32 32, %s32
        %p450 = scmp.lt.s32.totalorder %s449, 63
        %s451 = scalar_select %p450, %s449, 63
        %s452 = smul.addr %s451, 8
        %s453 = scalar_lea.vmem %s3, %s452
        %p454 = pneg %p141
        %p455 = pneg %p138
        %p456 = pneg %p162
        %p457 = pneg %p159
        %p458 = pneg %p183
        %p459 = pneg %p180
        %p460 = pneg %p204
        %p461 = pneg %p201
        %p462 = pneg %p230
        %p463 = pneg %p227
        %s464 = sand.u32 %s217, 1
        %s465 = scalar_lea.sflag [#allocation6], %s464
        %s466 = sand.u32 %s217, 1
        %s467 = smul.addr %s466, 128
        %s468 = scalar_lea.vmem [#allocation12], %s467
        %s469 = smul.u32 8, %s32
        %s470 = smul.u32 2, %s33
        %s471 = smul.u32 32, %s33
        %s472 = smul.u32 32, %s32
        %s473 = smul.u32 32, %s32
        %p474 = scmp.lt.s32.totalorder %s473, 63
        %s475 = scalar_select %p474, %s473, 63
        %s476 = smul.addr %s475, 8
        %s477 = scalar_lea.vmem %s3, %s476
        %s478 = smul.u32 32, %s32
        %s479 = smul.u32 32, %s32
        %p481 = scmp.eq.s32.totalorder %s33, 0
        // Predicated region
        $region88: #{tpu_custom_call.1} parent=66 // pred_check
          %p482 = pneg %p481
        $region89: #{tpu_custom_call.1} parent=66 // pred_check_branch
          %484 = sbr.rel (%p482) target = $region91
        $region90: #{tpu_custom_call.1} parent=66 // pred_region
          %485 = vst [vmem:[#allocation2] sm:$0xff] 0.0
          %486 = vst [vmem:[#allocation2 + $0x8] sm:$0xff] 0.0
          %487 = vst [vmem:[#allocation2 + $0x10] sm:$0xff] 0.0
          %488 = vst [vmem:[#allocation2 + $0x18] sm:$0xff] 0.0
          %489 = vst [vmem:[#allocation2 + $0x20] sm:$0xff] 0.0
          %490 = vst [vmem:[#allocation2 + $0x28] sm:$0xff] 0.0
          %491 = vst [vmem:[#allocation2 + $0x30] sm:$0xff] 0.0
          %492 = vst [vmem:[#allocation2 + $0x38] sm:$0xff] 0.0
          %493 = vst [vmem:[#allocation2 + $0x40] sm:$0xff] 0.0
          %494 = vst [vmem:[#allocation2 + $0x48] sm:$0xff] 0.0
          %495 = vst [vmem:[#allocation2 + $0x50] sm:$0xff] 0.0
          %496 = vst [vmem:[#allocation2 + $0x58] sm:$0xff] 0.0
          %497 = vst [vmem:[#allocation2 + $0x60] sm:$0xff] 0.0
          %498 = vst [vmem:[#allocation2 + $0x68] sm:$0xff] 0.0
          %499 = vst [vmem:[#allocation2 + $0x70] sm:$0xff] 0.0
          %500 = vst [vmem:[#allocation2 + $0x78] sm:$0xff] 0.0
          %501 = vst [vmem:[#allocation2 + $0x80] sm:$0xff] 0.0
          %502 = vst [vmem:[#allocation2 + $0x88] sm:$0xff] 0.0
          %503 = vst [vmem:[#allocation2 + $0x90] sm:$0xff] 0.0
          %504 = vst [vmem:[#allocation2 + $0x98] sm:$0xff] 0.0
          %505 = vst [vmem:[#allocation2 + $0xa0] sm:$0xff] 0.0
          %506 = vst [vmem:[#allocation2 + $0xa8] sm:$0xff] 0.0
          %507 = vst [vmem:[#allocation2 + $0xb0] sm:$0xff] 0.0
          %508 = vst [vmem:[#allocation2 + $0xb8] sm:$0xff] 0.0
          %509 = vst [vmem:[#allocation2 + $0xc0] sm:$0xff] 0.0
          %510 = vst [vmem:[#allocation2 + $0xc8] sm:$0xff] 0.0
          %511 = vst [vmem:[#allocation2 + $0xd0] sm:$0xff] 0.0
          %512 = vst [vmem:[#allocation2 + $0xd8] sm:$0xff] 0.0
          %513 = vst [vmem:[#allocation2 + $0xe0] sm:$0xff] 0.0
          %514 = vst [vmem:[#allocation2 + $0xe8] sm:$0xff] 0.0
          %515 = vst [vmem:[#allocation2 + $0xf0] sm:$0xff] 0.0
          %516 = vst [vmem:[#allocation2 + $0xf8] sm:$0xff] 0.0
        $region91: #{tpu_custom_call.1} parent=66 // pred_fallthru
          _
        %v517 = vld [vmem:[%s399] sm:$0xff]
        %v518 = vld [vmem:[%s399 + $0x8] sm:$0xff]
        %v519 = vld [vmem:[%s399 + $0x10] sm:$0xff]
        %v520 = vld [vmem:[%s399 + $0x18] sm:$0xff]
        %v521 = vld [vmem:[%s399 + $0x20] sm:$0xff]
        %v522 = vld [vmem:[%s399 + $0x28] sm:$0xff]
        %v523 = vld [vmem:[%s399 + $0x30] sm:$0xff]
        %v524 = vld [vmem:[%s399 + $0x38] sm:$0xff]
        %v525 = vld [vmem:[%s399 + $0x40] sm:$0xff]
        %v526 = vld [vmem:[%s399 + $0x48] sm:$0xff]
        %v527 = vld [vmem:[%s399 + $0x50] sm:$0xff]
        %v528 = vld [vmem:[%s399 + $0x58] sm:$0xff]
        %v529 = vld [vmem:[%s399 + $0x60] sm:$0xff]
        %v530 = vld [vmem:[%s399 + $0x68] sm:$0xff]
        %v531 = vld [vmem:[%s399 + $0x70] sm:$0xff]
        %v532 = vld [vmem:[%s399 + $0x78] sm:$0xff]
        %v533 = vunpack.c.l.s8.bf16 %v517
        %v534 = vunpack.c.l.s8.bf16 %v518
        %v535 = vunpack.c.h.s8.bf16 %v517
        %v536 = vunpack.c.h.s8.bf16 %v518
        %v537 = vunpack.c.l.s8.bf16 %v519
        %v538 = vunpack.c.l.s8.bf16 %v520
        %v539 = vunpack.c.h.s8.bf16 %v519
        %v540 = vunpack.c.h.s8.bf16 %v520
        %v541 = vunpack.c.l.s8.bf16 %v521
        %v542 = vunpack.c.l.s8.bf16 %v522
        %v543 = vunpack.c.h.s8.bf16 %v521
        %v544 = vunpack.c.h.s8.bf16 %v522
        %v545 = vunpack.c.l.s8.bf16 %v523
        %v546 = vunpack.c.l.s8.bf16 %v524
        %v547 = vunpack.c.h.s8.bf16 %v523
        %v548 = vunpack.c.h.s8.bf16 %v524
        %v549 = vunpack.c.l.s8.bf16 %v525
        %v550 = vunpack.c.l.s8.bf16 %v526
        %v551 = vunpack.c.h.s8.bf16 %v525
        %v552 = vunpack.c.h.s8.bf16 %v526
        %v553 = vunpack.c.l.s8.bf16 %v527
        %v554 = vunpack.c.l.s8.bf16 %v528
        %v555 = vunpack.c.h.s8.bf16 %v527
        %v556 = vunpack.c.h.s8.bf16 %v528
        %v557 = vunpack.c.l.s8.bf16 %v529
        %v558 = vunpack.c.l.s8.bf16 %v530
        %v559 = vunpack.c.h.s8.bf16 %v529
        %v560 = vunpack.c.h.s8.bf16 %v530
        %v561 = vunpack.c.l.s8.bf16 %v531
        %v562 = vunpack.c.l.s8.bf16 %v532
        %v563 = vunpack.c.h.s8.bf16 %v531
        %v564 = vunpack.c.h.s8.bf16 %v532
        %v565 = vld [vmem:[#allocation2] sm:$0xff]
        %v566 = vld [vmem:[#allocation2 + $0x8] sm:$0xff]
        %v567 = vld [vmem:[#allocation2 + $0x10] sm:$0xff]
        %v568 = vld [vmem:[#allocation2 + $0x18] sm:$0xff]
        %v569 = vld [vmem:[#allocation2 + $0x20] sm:$0xff]
        %v570 = vld [vmem:[#allocation2 + $0x28] sm:$0xff]
        %v571 = vld [vmem:[#allocation2 + $0x30] sm:$0xff]
        %v572 = vld [vmem:[#allocation2 + $0x38] sm:$0xff]
        %v573 = vld [vmem:[#allocation2 + $0x40] sm:$0xff]
        %v574 = vld [vmem:[#allocation2 + $0x48] sm:$0xff]
        %v575 = vld [vmem:[#allocation2 + $0x50] sm:$0xff]
        %v576 = vld [vmem:[#allocation2 + $0x58] sm:$0xff]
        %v577 = vld [vmem:[#allocation2 + $0x60] sm:$0xff]
        %v578 = vld [vmem:[#allocation2 + $0x68] sm:$0xff]
        %v579 = vld [vmem:[#allocation2 + $0x70] sm:$0xff]
        %v580 = vld [vmem:[#allocation2 + $0x78] sm:$0xff]
        %v581 = vld [vmem:[#allocation2 + $0x80] sm:$0xff]
        %v582 = vld [vmem:[#allocation2 + $0x88] sm:$0xff]
        %v583 = vld [vmem:[#allocation2 + $0x90] sm:$0xff]
        %v584 = vld [vmem:[#allocation2 + $0x98] sm:$0xff]
        %v585 = vld [vmem:[#allocation2 + $0xa0] sm:$0xff]
        %v586 = vld [vmem:[#allocation2 + $0xa8] sm:$0xff]
        %v587 = vld [vmem:[#allocation2 + $0xb0] sm:$0xff]
        %v588 = vld [vmem:[#allocation2 + $0xb8] sm:$0xff]
        %v589 = vld [vmem:[#allocation2 + $0xc0] sm:$0xff]
        %v590 = vld [vmem:[#allocation2 + $0xc8] sm:$0xff]
        %v591 = vld [vmem:[#allocation2 + $0xd0] sm:$0xff]
        %v592 = vld [vmem:[#allocation2 + $0xd8] sm:$0xff]
        %v593 = vld [vmem:[#allocation2 + $0xe0] sm:$0xff]
        %v594 = vld [vmem:[#allocation2 + $0xe8] sm:$0xff]
        %v595 = vld [vmem:[#allocation2 + $0xf0] sm:$0xff]
        %v596 = vld [vmem:[#allocation2 + $0xf8] sm:$0xff]
        %v597 = vld [vmem:[%s407] sm:$0xf]
        %v598 = vld [vmem:[%s407 + $0x4] sm:$0xf]
        %v599 = vld [vmem:[%s407 + $0x8] sm:$0xf]
        %v600 = vld [vmem:[%s407 + $0xc] sm:$0xf]
        %v601 = vld [vmem:[%s407 + $0x10] sm:$0xf]
        %v602 = vld [vmem:[%s407 + $0x14] sm:$0xf]
        %v603 = vld [vmem:[%s407 + $0x18] sm:$0xf]
        %v604 = vld [vmem:[%s407 + $0x1c] sm:$0xf]
        %v605 = vld [vmem:[%s407 + $0x20] sm:$0xf]
        %v606 = vld [vmem:[%s407 + $0x24] sm:$0xf]
        %v607 = vld [vmem:[%s407 + $0x28] sm:$0xf]
        %v608 = vld [vmem:[%s407 + $0x2c] sm:$0xf]
        %v609 = vld [vmem:[%s407 + $0x30] sm:$0xf]
        %v610 = vld [vmem:[%s407 + $0x34] sm:$0xf]
        %v611 = vld [vmem:[%s407 + $0x38] sm:$0xf]
        %v612 = vld [vmem:[%s407 + $0x3c] sm:$0xf]
        %v613 = vld [vmem:[%s407 + $0x40] sm:$0xf]
        %v614 = vld [vmem:[%s407 + $0x44] sm:$0xf]
        %v615 = vld [vmem:[%s407 + $0x48] sm:$0xf]
        %v616 = vld [vmem:[%s407 + $0x4c] sm:$0xf]
        %v617 = vld [vmem:[%s407 + $0x50] sm:$0xf]
        %v618 = vld [vmem:[%s407 + $0x54] sm:$0xf]
        %v619 = vld [vmem:[%s407 + $0x58] sm:$0xf]
        %v620 = vld [vmem:[%s407 + $0x5c] sm:$0xf]
        %v621 = vld [vmem:[%s407 + $0x60] sm:$0xf]
        %v622 = vld [vmem:[%s407 + $0x64] sm:$0xf]
        %v623 = vld [vmem:[%s407 + $0x68] sm:$0xf]
        %v624 = vld [vmem:[%s407 + $0x6c] sm:$0xf]
        %v625 = vld [vmem:[%s407 + $0x70] sm:$0xf]
        %v626 = vld [vmem:[%s407 + $0x74] sm:$0xf]
        %v627 = vld [vmem:[%s407 + $0x78] sm:$0xf]
        %v628 = vld [vmem:[%s407 + $0x7c] sm:$0xf]
        %v661 = vunpack.c.l.b16 %v597
        %v662 = vunpack.c.l.b16 %v598
        %v663 = vunpack.c.l.b16 %v599
        %v664 = vunpack.c.l.b16 %v600
        %v665 = vunpack.c.l.b16 %v601
        %v666 = vunpack.c.l.b16 %v602
        %v667 = vunpack.c.l.b16 %v603
        %v668 = vunpack.c.l.b16 %v604
        %v669 = vunpack.c.l.b16 %v605
        %v670 = vunpack.c.l.b16 %v606
        %v671 = vunpack.c.l.b16 %v607
        %v672 = vunpack.c.l.b16 %v608
        %v673 = vunpack.c.l.b16 %v609
        %v674 = vunpack.c.l.b16 %v610
        %v675 = vunpack.c.l.b16 %v611
        %v676 = vunpack.c.l.b16 %v612
        %v677 = vunpack.c.l.b16 %v613
        %v678 = vunpack.c.l.b16 %v614
        %v679 = vunpack.c.l.b16 %v615
        %v680 = vunpack.c.l.b16 %v616
        %v681 = vunpack.c.l.b16 %v617
        %v682 = vunpack.c.l.b16 %v618
        %v683 = vunpack.c.l.b16 %v619
        %v684 = vunpack.c.l.b16 %v620
        %v685 = vunpack.c.l.b16 %v621
        %v686 = vunpack.c.l.b16 %v622
        %v687 = vunpack.c.l.b16 %v623
        %v688 = vunpack.c.l.b16 %v624
        %v689 = vunpack.c.l.b16 %v625
        %v690 = vunpack.c.l.b16 %v626
        %v691 = vunpack.c.l.b16 %v627
        %v692 = vunpack.c.l.b16 %v628
        %v693 = vpack.c.b16 %v662, %v661
        %v694 = vpack.c.b16 %v664, %v663
        %v695 = vpack.c.b16 %v666, %v665
        %v696 = vpack.c.b16 %v668, %v667
        %v697 = vpack.c.b16 %v670, %v669
        %v698 = vpack.c.b16 %v672, %v671
        %v699 = vpack.c.b16 %v674, %v673
        %v700 = vpack.c.b16 %v676, %v675
        %v701 = vpack.c.b16 %v678, %v677
        %v702 = vpack.c.b16 %v680, %v679
        %v703 = vpack.c.b16 %v682, %v681
        %v704 = vpack.c.b16 %v684, %v683
        %v705 = vpack.c.b16 %v686, %v685
        %v706 = vpack.c.b16 %v688, %v687
        %v707 = vpack.c.b16 %v690, %v689
        %v708 = vpack.c.b16 %v692, %v691
        %725 = vmatprep.subr.bf16.mxu0 0
        %726 = vmatpush1.bf16.msra.mxu0 %v700
        %727 = vmatprep.subr.bf16.mxu0 0
        %728 = vmatpush1.bf16.msra.mxu0 %v699
        %729 = vmatprep.subr.bf16.mxu0 0
        %730 = vmatpush1.bf16.msra.mxu0 %v698
        %731 = vmatprep.subr.bf16.mxu0 0
        %732 = vmatpush1.bf16.msra.mxu0 %v697
        %733 = vmatprep.subr.bf16.mxu0 0
        %734 = vmatpush1.bf16.msra.mxu0 %v696
        %735 = vmatprep.subr.bf16.mxu0 0
        %736 = vmatpush1.bf16.msra.mxu0 %v695
        %737 = vmatprep.subr.bf16.mxu0 0
        %738 = vmatpush1.bf16.msra.mxu0 %v694
        %739 = vmatprep.subr.bf16.mxu0 0
        %740 = vmatpush1.bf16.msra.mxu0 %v693
        %741 = vmatprep.subr.bf16.mxu0 0
        %742 = vmatpush2.bf16.msra.mxu0 %v708
        %743 = vmatprep.subr.bf16.mxu0 0
        %744 = vmatpush2.bf16.msra.mxu0 %v707
        %745 = vmatprep.subr.bf16.mxu0 0
        %746 = vmatpush2.bf16.msra.mxu0 %v706
        %747 = vmatprep.subr.bf16.mxu0 0
        %748 = vmatpush2.bf16.msra.mxu0 %v705
        %749 = vmatprep.subr.bf16.mxu0 0
        %750 = vmatpush2.bf16.msra.mxu0 %v704
        %751 = vmatprep.subr.bf16.mxu0 0
        %752 = vmatpush2.bf16.msra.mxu0 %v703
        %753 = vmatprep.subr.bf16.mxu0 0
        %754 = vmatpush2.bf16.msra.mxu0 %v702
        %755 = vmatprep.subr.bf16.mxu0 0
        %756 = vmatpush2.bf16.msra.mxu0 %v701
        %757 = vmatprep.mubr.bf16.mxu0 %v534
        %758 = vmatmul.mubr.bf16.gmra.mxu0 %v533
        %v759 = vpop.f32.mrf.mxu0
        %v760 = vadd.f32 0.0, %v759
        %v761 = vpop.f32.mrf.mxu0
        %v762 = vpop.f32.mrf.mxu0
        %v763 = vadd.f32 0.0, %v762
        %v764 = vpop.f32.mrf.mxu0
        %765 = vmatprep.mubr.bf16.mxu0 %v536
        %766 = vmatmul.mubr.bf16.gmra.mxu0 %v535
        %v767 = vpop.f32.mrf.mxu0
        %v768 = vadd.f32 0.0, %v767
        %v769 = vpop.f32.mrf.mxu0
        %v770 = vpop.f32.mrf.mxu0
        %v771 = vadd.f32 0.0, %v770
        %v772 = vpop.f32.mrf.mxu0
        %773 = vmatprep.mubr.bf16.mxu0 %v538
        %774 = vmatmul.mubr.bf16.gmra.mxu0 %v537
        %v775 = vpop.f32.mrf.mxu0
        %v776 = vadd.f32 0.0, %v775
        %v777 = vpop.f32.mrf.mxu0
        %v778 = vpop.f32.mrf.mxu0
        %v779 = vadd.f32 0.0, %v778
        %v780 = vpop.f32.mrf.mxu0
        %781 = vmatprep.mubr.bf16.mxu0 %v540
        %782 = vmatmul.mubr.bf16.gmra.mxu0 %v539
        %v783 = vpop.f32.mrf.mxu0
        %v784 = vadd.f32 0.0, %v783
        %v785 = vpop.f32.mrf.mxu0
        %v786 = vpop.f32.mrf.mxu0
        %v787 = vadd.f32 0.0, %v786
        %v788 = vpop.f32.mrf.mxu0
        %789 = vmatprep.mubr.bf16.mxu0 %v542
        %790 = vmatmul.mubr.bf16.gmra.mxu0 %v541
        %v791 = vpop.f32.mrf.mxu0
        %v792 = vadd.f32 0.0, %v791
        %v793 = vpop.f32.mrf.mxu0
        %v794 = vpop.f32.mrf.mxu0
        %v795 = vadd.f32 0.0, %v794
        %v796 = vpop.f32.mrf.mxu0
        %797 = vmatprep.mubr.bf16.mxu0 %v544
        %798 = vmatmul.mubr.bf16.gmra.mxu0 %v543
        %v799 = vpop.f32.mrf.mxu0
        %v800 = vadd.f32 0.0, %v799
        %v801 = vpop.f32.mrf.mxu0
        %v802 = vpop.f32.mrf.mxu0
        %v803 = vadd.f32 0.0, %v802
        %v804 = vpop.f32.mrf.mxu0
        %805 = vmatprep.mubr.bf16.mxu0 %v546
        %806 = vmatmul.mubr.bf16.gmra.mxu0 %v545
        %v807 = vpop.f32.mrf.mxu0
        %v808 = vadd.f32 0.0, %v807
        %v809 = vpop.f32.mrf.mxu0
        %v810 = vpop.f32.mrf.mxu0
        %v811 = vadd.f32 0.0, %v810
        %v812 = vpop.f32.mrf.mxu0
        %813 = vmatprep.mubr.bf16.mxu0 %v548
        %814 = vmatmul.mubr.bf16.gmra.mxu0 %v547
        %v815 = vpop.f32.mrf.mxu0
        %v816 = vadd.f32 0.0, %v815
        %v817 = vpop.f32.mrf.mxu0
        %v818 = vpop.f32.mrf.mxu0
        %v819 = vadd.f32 0.0, %v818
        %v820 = vpop.f32.mrf.mxu0
        %821 = vmatprep.mubr.bf16.mxu0 %v550
        %822 = vmatmul.mubr.bf16.gmra.mxu0 %v549
        %v823 = vpop.f32.mrf.mxu0
        %v824 = vadd.f32 0.0, %v823
        %v825 = vpop.f32.mrf.mxu0
        %v826 = vpop.f32.mrf.mxu0
        %v827 = vadd.f32 0.0, %v826
        %v828 = vpop.f32.mrf.mxu0
        %829 = vmatprep.mubr.bf16.mxu0 %v552
        %830 = vmatmul.mubr.bf16.gmra.mxu0 %v551
        %v831 = vpop.f32.mrf.mxu0
        %v832 = vadd.f32 0.0, %v831
        %v833 = vpop.f32.mrf.mxu0
        %v834 = vpop.f32.mrf.mxu0
        %v835 = vadd.f32 0.0, %v834
        %v836 = vpop.f32.mrf.mxu0
        %837 = vmatprep.mubr.bf16.mxu0 %v554
        %838 = vmatmul.mubr.bf16.gmra.mxu0 %v553
        %v839 = vpop.f32.mrf.mxu0
        %v840 = vadd.f32 0.0, %v839
        %v841 = vpop.f32.mrf.mxu0
        %v842 = vpop.f32.mrf.mxu0
        %v843 = vadd.f32 0.0, %v842
        %v844 = vpop.f32.mrf.mxu0
        %845 = vmatprep.mubr.bf16.mxu0 %v556
        %846 = vmatmul.mubr.bf16.gmra.mxu0 %v555
        %v847 = vpop.f32.mrf.mxu0
        %v848 = vadd.f32 0.0, %v847
        %v849 = vpop.f32.mrf.mxu0
        %v850 = vpop.f32.mrf.mxu0
        %v851 = vadd.f32 0.0, %v850
        %v852 = vpop.f32.mrf.mxu0
        %853 = vmatprep.mubr.bf16.mxu0 %v558
        %854 = vmatmul.mubr.bf16.gmra.mxu0 %v557
        %v855 = vpop.f32.mrf.mxu0
        %v856 = vadd.f32 0.0, %v855
        %v857 = vpop.f32.mrf.mxu0
        %v858 = vpop.f32.mrf.mxu0
        %v859 = vadd.f32 0.0, %v858
        %v860 = vpop.f32.mrf.mxu0
        %861 = vmatprep.mubr.bf16.mxu0 %v560
        %862 = vmatmul.mubr.bf16.gmra.mxu0 %v559
        %v863 = vpop.f32.mrf.mxu0
        %v864 = vadd.f32 0.0, %v863
        %v865 = vpop.f32.mrf.mxu0
        %v866 = vpop.f32.mrf.mxu0
        %v867 = vadd.f32 0.0, %v866
        %v868 = vpop.f32.mrf.mxu0
        %869 = vmatprep.mubr.bf16.mxu0 %v562
        %870 = vmatmul.mubr.bf16.gmra.mxu0 %v561
        %v871 = vpop.f32.mrf.mxu0
        %v872 = vadd.f32 0.0, %v871
        %v873 = vpop.f32.mrf.mxu0
        %v874 = vpop.f32.mrf.mxu0
        %v875 = vadd.f32 0.0, %v874
        %v876 = vpop.f32.mrf.mxu0
        %877 = vmatprep.mubr.bf16.mxu0 %v564
        %878 = vmatmul.mubr.bf16.gmra.mxu0 %v563
        %v879 = vpop.f32.mrf.mxu0
        %v880 = vadd.f32 0.0, %v879
        %v881 = vpop.f32.mrf.mxu0
        %v882 = vpop.f32.mrf.mxu0
        %v883 = vadd.f32 0.0, %v882
        %v884 = vpop.f32.mrf.mxu0
        %885 = vdwg.mxu0
        %v886 = vadd.f32 %v565, %v760
        %v887 = vadd.f32 %v566, %v763
        %v888 = vadd.f32 %v567, %v768
        %v889 = vadd.f32 %v568, %v771
        %v890 = vadd.f32 %v569, %v776
        %v891 = vadd.f32 %v570, %v779
        %v892 = vadd.f32 %v571, %v784
        %v893 = vadd.f32 %v572, %v787
        %v894 = vadd.f32 %v573, %v792
        %v895 = vadd.f32 %v574, %v795
        %v896 = vadd.f32 %v575, %v800
        %v897 = vadd.f32 %v576, %v803
        %v898 = vadd.f32 %v577, %v808
        %v899 = vadd.f32 %v578, %v811
        %v900 = vadd.f32 %v579, %v816
        %v901 = vadd.f32 %v580, %v819
        %v902 = vadd.f32 %v581, %v824
        %v903 = vadd.f32 %v582, %v827
        %v904 = vadd.f32 %v583, %v832
        %v905 = vadd.f32 %v584, %v835
        %v906 = vadd.f32 %v585, %v840
        %v907 = vadd.f32 %v586, %v843
        %v908 = vadd.f32 %v587, %v848
        %v909 = vadd.f32 %v588, %v851
        %v910 = vadd.f32 %v589, %v856
        %v911 = vadd.f32 %v590, %v859
        %v912 = vadd.f32 %v591, %v864
        %v913 = vadd.f32 %v592, %v867
        %v914 = vadd.f32 %v593, %v872
        %v915 = vadd.f32 %v594, %v875
        %v916 = vadd.f32 %v595, %v880
        %v917 = vadd.f32 %v596, %v883
        %918 = vst [vmem:[#allocation2] sm:$0xff] %v886
        %919 = vst [vmem:[#allocation2 + $0x8] sm:$0xff] %v887
        %920 = vst [vmem:[#allocation2 + $0x10] sm:$0xff] %v888
        %921 = vst [vmem:[#allocation2 + $0x18] sm:$0xff] %v889
        %922 = vst [vmem:[#allocation2 + $0x20] sm:$0xff] %v890
        %923 = vst [vmem:[#allocation2 + $0x28] sm:$0xff] %v891
        %924 = vst [vmem:[#allocation2 + $0x30] sm:$0xff] %v892
        %925 = vst [vmem:[#allocation2 + $0x38] sm:$0xff] %v893
        %926 = vst [vmem:[#allocation2 + $0x40] sm:$0xff] %v894
        %927 = vst [vmem:[#allocation2 + $0x48] sm:$0xff] %v895
        %928 = vst [vmem:[#allocation2 + $0x50] sm:$0xff] %v896
        %929 = vst [vmem:[#allocation2 + $0x58] sm:$0xff] %v897
        %930 = vst [vmem:[#allocation2 + $0x60] sm:$0xff] %v898
        %931 = vst [vmem:[#allocation2 + $0x68] sm:$0xff] %v899
        %932 = vst [vmem:[#allocation2 + $0x70] sm:$0xff] %v900
        %933 = vst [vmem:[#allocation2 + $0x78] sm:$0xff] %v901
        %934 = vst [vmem:[#allocation2 + $0x80] sm:$0xff] %v902
        %935 = vst [vmem:[#allocation2 + $0x88] sm:$0xff] %v903
        %936 = vst [vmem:[#allocation2 + $0x90] sm:$0xff] %v904
        %937 = vst [vmem:[#allocation2 + $0x98] sm:$0xff] %v905
        %938 = vst [vmem:[#allocation2 + $0xa0] sm:$0xff] %v906
        %939 = vst [vmem:[#allocation2 + $0xa8] sm:$0xff] %v907
        %940 = vst [vmem:[#allocation2 + $0xb0] sm:$0xff] %v908
        %941 = vst [vmem:[#allocation2 + $0xb8] sm:$0xff] %v909
        %942 = vst [vmem:[#allocation2 + $0xc0] sm:$0xff] %v910
        %943 = vst [vmem:[#allocation2 + $0xc8] sm:$0xff] %v911
        %944 = vst [vmem:[#allocation2 + $0xd0] sm:$0xff] %v912
        %945 = vst [vmem:[#allocation2 + $0xd8] sm:$0xff] %v913
        %946 = vst [vmem:[#allocation2 + $0xe0] sm:$0xff] %v914
        %947 = vst [vmem:[#allocation2 + $0xe8] sm:$0xff] %v915
        %948 = vst [vmem:[#allocation2 + $0xf0] sm:$0xff] %v916
        %949 = vst [vmem:[#allocation2 + $0xf8] sm:$0xff] %v917
        %p950 = scmp.eq.s32.totalorder %s33, 1
        // Predicated region
        $region92: #{tpu_custom_call.1} parent=66 // pred_check
          %p951 = pneg %p950
        $region93: #{tpu_custom_call.1} parent=66 // pred_check_branch
          %953 = sbr.rel (%p951) target = $region95
        $region94: #{tpu_custom_call.1} parent=66 // pred_region
          %v954 = vld [vmem:[#allocation2] sm:$0xff]
          %v955 = vld [vmem:[#allocation2 + $0x8] sm:$0xff]
          %v956 = vld [vmem:[#allocation2 + $0x10] sm:$0xff]
          %v957 = vld [vmem:[#allocation2 + $0x18] sm:$0xff]
          %v958 = vld [vmem:[#allocation2 + $0x20] sm:$0xff]
          %v959 = vld [vmem:[#allocation2 + $0x28] sm:$0xff]
          %v960 = vld [vmem:[#allocation2 + $0x30] sm:$0xff]
          %v961 = vld [vmem:[#allocation2 + $0x38] sm:$0xff]
          %v962 = vld [vmem:[#allocation2 + $0x40] sm:$0xff]
          %v963 = vld [vmem:[#allocation2 + $0x48] sm:$0xff]
          %v964 = vld [vmem:[#allocation2 + $0x50] sm:$0xff]
          %v965 = vld [vmem:[#allocation2 + $0x58] sm:$0xff]
          %v966 = vld [vmem:[#allocation2 + $0x60] sm:$0xff]
          %v967 = vld [vmem:[#allocation2 + $0x68] sm:$0xff]
          %v968 = vld [vmem:[#allocation2 + $0x70] sm:$0xff]
          %v969 = vld [vmem:[#allocation2 + $0x78] sm:$0xff]
          %v970 = vld [vmem:[#allocation2 + $0x80] sm:$0xff]
          %v971 = vld [vmem:[#allocation2 + $0x88] sm:$0xff]
          %v972 = vld [vmem:[#allocation2 + $0x90] sm:$0xff]
          %v973 = vld [vmem:[#allocation2 + $0x98] sm:$0xff]
          %v974 = vld [vmem:[#allocation2 + $0xa0] sm:$0xff]
          %v975 = vld [vmem:[#allocation2 + $0xa8] sm:$0xff]
          %v976 = vld [vmem:[#allocation2 + $0xb0] sm:$0xff]
          %v977 = vld [vmem:[#allocation2 + $0xb8] sm:$0xff]
          %v978 = vld [vmem:[#allocation2 + $0xc0] sm:$0xff]
          %v979 = vld [vmem:[#allocation2 + $0xc8] sm:$0xff]
          %v980 = vld [vmem:[#allocation2 + $0xd0] sm:$0xff]
          %v981 = vld [vmem:[#allocation2 + $0xd8] sm:$0xff]
          %v982 = vld [vmem:[#allocation2 + $0xe0] sm:$0xff]
          %v983 = vld [vmem:[#allocation2 + $0xe8] sm:$0xff]
          %v984 = vld [vmem:[#allocation2 + $0xf0] sm:$0xff]
          %v985 = vld [vmem:[#allocation2 + $0xf8] sm:$0xff]
          %v986 = vld [vmem:[%s477] sm:$0xff]
          %v987 = vld [vmem:[%s477 + $0x8] sm:$0xff]
          %v988 = vld [vmem:[%s477 + $0x10] sm:$0xff]
          %v989 = vld [vmem:[%s477 + $0x18] sm:$0xff]
          %v990 = vld [vmem:[%s477 + $0x20] sm:$0xff]
          %v991 = vld [vmem:[%s477 + $0x28] sm:$0xff]
          %v992 = vld [vmem:[%s477 + $0x30] sm:$0xff]
          %v993 = vld [vmem:[%s477 + $0x38] sm:$0xff]
          %v994 = vld [vmem:[%s477 + $0x40] sm:$0xff]
          %v995 = vld [vmem:[%s477 + $0x48] sm:$0xff]
          %v996 = vld [vmem:[%s477 + $0x50] sm:$0xff]
          %v997 = vld [vmem:[%s477 + $0x58] sm:$0xff]
          %v998 = vld [vmem:[%s477 + $0x60] sm:$0xff]
          %v999 = vld [vmem:[%s477 + $0x68] sm:$0xff]
          %v1000 = vld [vmem:[%s477 + $0x70] sm:$0xff]
          %v1001 = vld [vmem:[%s477 + $0x78] sm:$0xff]
          %v1002 = vld [vmem:[%s477 + $0x80] sm:$0xff]
          %v1003 = vld [vmem:[%s477 + $0x88] sm:$0xff]
          %v1004 = vld [vmem:[%s477 + $0x90] sm:$0xff]
          %v1005 = vld [vmem:[%s477 + $0x98] sm:$0xff]
          %v1006 = vld [vmem:[%s477 + $0xa0] sm:$0xff]
          %v1007 = vld [vmem:[%s477 + $0xa8] sm:$0xff]
          %v1008 = vld [vmem:[%s477 + $0xb0] sm:$0xff]
          %v1009 = vld [vmem:[%s477 + $0xb8] sm:$0xff]
          %v1010 = vld [vmem:[%s477 + $0xc0] sm:$0xff]
          %v1011 = vld [vmem:[%s477 + $0xc8] sm:$0xff]
          %v1012 = vld [vmem:[%s477 + $0xd0] sm:$0xff]
          %v1013 = vld [vmem:[%s477 + $0xd8] sm:$0xff]
          %v1014 = vld [vmem:[%s477 + $0xe0] sm:$0xff]
          %v1015 = vld [vmem:[%s477 + $0xe8] sm:$0xff]
          %v1016 = vld [vmem:[%s477 + $0xf0] sm:$0xff]
          %v1017 = vld [vmem:[%s477 + $0xf8] sm:$0xff]
          %1019 = vset.pattern.permute.xlu0 0
          %1020 = vperm.xlu0 %1019, %v986
          %v1021 = vpop.permute.xlu0 %1020
          %1024 = vset.pattern.permute.xlu0 0
          %1025 = vperm.xlu0 %1024, %v987
          %v1026 = vpop.permute.xlu0 %1025
          %1029 = vset.pattern.permute.xlu0 0
          %1030 = vperm.xlu0 %1029, %v988
          %v1031 = vpop.permute.xlu0 %1030
          %1034 = vset.pattern.permute.xlu0 0
          %1035 = vperm.xlu0 %1034, %v989
          %v1036 = vpop.permute.xlu0 %1035
          %1039 = vset.pattern.permute.xlu0 0
          %1040 = vperm.xlu0 %1039, %v990
          %v1041 = vpop.permute.xlu0 %1040
          %1044 = vset.pattern.permute.xlu0 0
          %1045 = vperm.xlu0 %1044, %v991
          %v1046 = vpop.permute.xlu0 %1045
          %1049 = vset.pattern.permute.xlu0 0
          %1050 = vperm.xlu0 %1049, %v992
          %v1051 = vpop.permute.xlu0 %1050
          %1054 = vset.pattern.permute.xlu0 0
          %1055 = vperm.xlu0 %1054, %v993
          %v1056 = vpop.permute.xlu0 %1055
          %1059 = vset.pattern.permute.xlu0 0
          %1060 = vperm.xlu0 %1059, %v994
          %v1061 = vpop.permute.xlu0 %1060
          %1064 = vset.pattern.permute.xlu0 0
          %1065 = vperm.xlu0 %1064, %v995
          %v1066 = vpop.permute.xlu0 %1065
          %1069 = vset.pattern.permute.xlu0 0
          %1070 = vperm.xlu0 %1069, %v996
          %v1071 = vpop.permute.xlu0 %1070
          %1074 = vset.pattern.permute.xlu0 0
          %1075 = vperm.xlu0 %1074, %v997
          %v1076 = vpop.permute.xlu0 %1075
          %1079 = vset.pattern.permute.xlu0 0
          %1080 = vperm.xlu0 %1079, %v998
          %v1081 = vpop.permute.xlu0 %1080
          %1084 = vset.pattern.permute.xlu0 0
          %1085 = vperm.xlu0 %1084, %v999
          %v1086 = vpop.permute.xlu0 %1085
          %1089 = vset.pattern.permute.xlu0 0
          %1090 = vperm.xlu0 %1089, %v1000
          %v1091 = vpop.permute.xlu0 %1090
          %1094 = vset.pattern.permute.xlu0 0
          %1095 = vperm.xlu0 %1094, %v1001
          %v1096 = vpop.permute.xlu0 %1095
          %1099 = vset.pattern.permute.xlu0 0
          %1100 = vperm.xlu0 %1099, %v1002
          %v1101 = vpop.permute.xlu0 %1100
          %1104 = vset.pattern.permute.xlu0 0
          %1105 = vperm.xlu0 %1104, %v1003
          %v1106 = vpop.permute.xlu0 %1105
          %1109 = vset.pattern.permute.xlu0 0
          %1110 = vperm.xlu0 %1109, %v1004
          %v1111 = vpop.permute.xlu0 %1110
          %1114 = vset.pattern.permute.xlu0 0
          %1115 = vperm.xlu0 %1114, %v1005
          %v1116 = vpop.permute.xlu0 %1115
          %1119 = vset.pattern.permute.xlu0 0
          %1120 = vperm.xlu0 %1119, %v1006
          %v1121 = vpop.permute.xlu0 %1120
          %1124 = vset.pattern.permute.xlu0 0
          %1125 = vperm.xlu0 %1124, %v1007
          %v1126 = vpop.permute.xlu0 %1125
          %1129 = vset.pattern.permute.xlu0 0
          %1130 = vperm.xlu0 %1129, %v1008
          %v1131 = vpop.permute.xlu0 %1130
          %1134 = vset.pattern.permute.xlu0 0
          %1135 = vperm.xlu0 %1134, %v1009
          %v1136 = vpop.permute.xlu0 %1135
          %1139 = vset.pattern.permute.xlu0 0
          %1140 = vperm.xlu0 %1139, %v1010
          %v1141 = vpop.permute.xlu0 %1140
          %1144 = vset.pattern.permute.xlu0 0
          %1145 = vperm.xlu0 %1144, %v1011
          %v1146 = vpop.permute.xlu0 %1145
          %1149 = vset.pattern.permute.xlu0 0
          %1150 = vperm.xlu0 %1149, %v1012
          %v1151 = vpop.permute.xlu0 %1150
          %1154 = vset.pattern.permute.xlu0 0
          %1155 = vperm.xlu0 %1154, %v1013
          %v1156 = vpop.permute.xlu0 %1155
          %1159 = vset.pattern.permute.xlu0 0
          %1160 = vperm.xlu0 %1159, %v1014
          %v1161 = vpop.permute.xlu0 %1160
          %1164 = vset.pattern.permute.xlu0 0
          %1165 = vperm.xlu0 %1164, %v1015
          %v1166 = vpop.permute.xlu0 %1165
          %1169 = vset.pattern.permute.xlu0 0
          %1170 = vperm.xlu0 %1169, %v1016
          %v1171 = vpop.permute.xlu0 %1170
          %1174 = vset.pattern.permute.xlu0 0
          %1175 = vperm.xlu0 %1174, %v1017
          %v1176 = vpop.permute.xlu0 %1175
          %v1178 = vmul.f32 %v954, %v1021
          %v1179 = vmul.f32 %v955, %v1026
          %v1180 = vmul.f32 %v956, %v1031
          %v1181 = vmul.f32 %v957, %v1036
          %v1182 = vmul.f32 %v958, %v1041
          %v1183 = vmul.f32 %v959, %v1046
          %v1184 = vmul.f32 %v960, %v1051
          %v1185 = vmul.f32 %v961, %v1056
          %v1186 = vmul.f32 %v962, %v1061
          %v1187 = vmul.f32 %v963, %v1066
          %v1188 = vmul.f32 %v964, %v1071
          %v1189 = vmul.f32 %v965, %v1076
          %v1190 = vmul.f32 %v966, %v1081
          %v1191 = vmul.f32 %v967, %v1086
          %v1192 = vmul.f32 %v968, %v1091
          %v1193 = vmul.f32 %v969, %v1096
          %v1194 = vmul.f32 %v970, %v1101
          %v1195 = vmul.f32 %v971, %v1106
          %v1196 = vmul.f32 %v972, %v1111
          %v1197 = vmul.f32 %v973, %v1116
          %v1198 = vmul.f32 %v974, %v1121
          %v1199 = vmul.f32 %v975, %v1126
          %v1200 = vmul.f32 %v976, %v1131
          %v1201 = vmul.f32 %v977, %v1136
          %v1202 = vmul.f32 %v978, %v1141
          %v1203 = vmul.f32 %v979, %v1146
          %v1204 = vmul.f32 %v980, %v1151
          %v1205 = vmul.f32 %v981, %v1156
          %v1206 = vmul.f32 %v982, %v1161
          %v1207 = vmul.f32 %v983, %v1166
          %v1208 = vmul.f32 %v984, %v1171
          %v1209 = vmul.f32 %v985, %v1176
          %v1210 = vpack.c.bf16 %v1179, %v1178
          %v1211 = vpack.c.bf16 %v1181, %v1180
          %v1212 = vpack.c.bf16 %v1183, %v1182
          %v1213 = vpack.c.bf16 %v1185, %v1184
          %v1214 = vpack.c.bf16 %v1187, %v1186
          %v1215 = vpack.c.bf16 %v1189, %v1188
          %v1216 = vpack.c.bf16 %v1191, %v1190
          %v1217 = vpack.c.bf16 %v1193, %v1192
          %v1218 = vpack.c.bf16 %v1195, %v1194
          %v1219 = vpack.c.bf16 %v1197, %v1196
          %v1220 = vpack.c.bf16 %v1199, %v1198
          %v1221 = vpack.c.bf16 %v1201, %v1200
          %v1222 = vpack.c.bf16 %v1203, %v1202
          %v1223 = vpack.c.bf16 %v1205, %v1204
          %v1224 = vpack.c.bf16 %v1207, %v1206
          %v1225 = vpack.c.bf16 %v1209, %v1208
          %v1226 = vld [vmem:[#allocation9] sm:$0xf]
          %v1227 = vld [vmem:[#allocation9 + $0x4] sm:$0xf]
          %v1228 = vld [vmem:[#allocation9 + $0x8] sm:$0xf]
          %v1229 = vld [vmem:[#allocation9 + $0xc] sm:$0xf]
          %v1230 = vld [vmem:[#allocation9 + $0x10] sm:$0xf]
          %v1231 = vld [vmem:[#allocation9 + $0x14] sm:$0xf]
          %v1232 = vld [vmem:[#allocation9 + $0x18] sm:$0xf]
          %v1233 = vld [vmem:[#allocation9 + $0x1c] sm:$0xf]
          %v1234 = vld [vmem:[#allocation9 + $0x20] sm:$0xf]
          %v1235 = vld [vmem:[#allocation9 + $0x24] sm:$0xf]
          %v1236 = vld [vmem:[#allocation9 + $0x28] sm:$0xf]
          %v1237 = vld [vmem:[#allocation9 + $0x2c] sm:$0xf]
          %v1238 = vld [vmem:[#allocation9 + $0x30] sm:$0xf]
          %v1239 = vld [vmem:[#allocation9 + $0x34] sm:$0xf]
          %v1240 = vld [vmem:[#allocation9 + $0x38] sm:$0xf]
          %v1241 = vld [vmem:[#allocation9 + $0x3c] sm:$0xf]
          %v1242 = vld [vmem:[%s416] sm:$0xf]
          %v1243 = vld [vmem:[%s416 + $0x4] sm:$0xf]
          %v1244 = vld [vmem:[%s416 + $0x8] sm:$0xf]
          %v1245 = vld [vmem:[%s416 + $0xc] sm:$0xf]
          %v1246 = vld [vmem:[%s416 + $0x10] sm:$0xf]
          %v1247 = vld [vmem:[%s416 + $0x14] sm:$0xf]
          %v1248 = vld [vmem:[%s416 + $0x18] sm:$0xf]
          %v1249 = vld [vmem:[%s416 + $0x1c] sm:$0xf]
          %v1250 = vld [vmem:[%s416 + $0x20] sm:$0xf]
          %v1251 = vld [vmem:[%s416 + $0x24] sm:$0xf]
          %v1252 = vld [vmem:[%s416 + $0x28] sm:$0xf]
          %v1253 = vld [vmem:[%s416 + $0x2c] sm:$0xf]
          %v1254 = vld [vmem:[%s416 + $0x30] sm:$0xf]
          %v1255 = vld [vmem:[%s416 + $0x34] sm:$0xf]
          %v1256 = vld [vmem:[%s416 + $0x38] sm:$0xf]
          %v1257 = vld [vmem:[%s416 + $0x3c] sm:$0xf]
          %v1258 = vld [vmem:[%s416 + $0x40] sm:$0xf]
          %v1259 = vld [vmem:[%s416 + $0x44] sm:$0xf]
          %v1260 = vld [vmem:[%s416 + $0x48] sm:$0xf]
          %v1261 = vld [vmem:[%s416 + $0x4c] sm:$0xf]
          %v1262 = vld [vmem:[%s416 + $0x50] sm:$0xf]
          %v1263 = vld [vmem:[%s416 + $0x54] sm:$0xf]
          %v1264 = vld [vmem:[%s416 + $0x58] sm:$0xf]
          %v1265 = vld [vmem:[%s416 + $0x5c] sm:$0xf]
          %v1266 = vld [vmem:[%s416 + $0x60] sm:$0xf]
          %v1267 = vld [vmem:[%s416 + $0x64] sm:$0xf]
          %v1268 = vld [vmem:[%s416 + $0x68] sm:$0xf]
          %v1269 = vld [vmem:[%s416 + $0x6c] sm:$0xf]
          %v1270 = vld [vmem:[%s416 + $0x70] sm:$0xf]
          %v1271 = vld [vmem:[%s416 + $0x74] sm:$0xf]
          %v1272 = vld [vmem:[%s416 + $0x78] sm:$0xf]
          %v1273 = vld [vmem:[%s416 + $0x7c] sm:$0xf]
          %v1274 = vld [vmem:[#allocation10] sm:$0xf]
          %v1275 = vld [vmem:[#allocation10 + $0x4] sm:$0xf]
          %v1276 = vld [vmem:[#allocation10 + $0x8] sm:$0xf]
          %v1277 = vld [vmem:[#allocation10 + $0xc] sm:$0xf]
          %v1278 = vld [vmem:[#allocation10 + $0x10] sm:$0xf]
          %v1279 = vld [vmem:[#allocation10 + $0x14] sm:$0xf]
          %v1280 = vld [vmem:[#allocation10 + $0x18] sm:$0xf]
          %v1281 = vld [vmem:[#allocation10 + $0x1c] sm:$0xf]
          %v1282 = vld [vmem:[#allocation10 + $0x20] sm:$0xf]
          %v1283 = vld [vmem:[#allocation10 + $0x24] sm:$0xf]
          %v1284 = vld [vmem:[#allocation10 + $0x28] sm:$0xf]
          %v1285 = vld [vmem:[#allocation10 + $0x2c] sm:$0xf]
          %v1286 = vld [vmem:[#allocation10 + $0x30] sm:$0xf]
          %v1287 = vld [vmem:[#allocation10 + $0x34] sm:$0xf]
          %v1288 = vld [vmem:[#allocation10 + $0x38] sm:$0xf]
          %v1289 = vld [vmem:[#allocation10 + $0x3c] sm:$0xf]
          %v1322 = vunpack.c.l.b16 %v1242
          %v1323 = vunpack.c.l.b16 %v1243
          %v1324 = vunpack.c.l.b16 %v1244
          %v1325 = vunpack.c.l.b16 %v1245
          %v1326 = vunpack.c.l.b16 %v1246
          %v1327 = vunpack.c.l.b16 %v1247
          %v1328 = vunpack.c.l.b16 %v1248
          %v1329 = vunpack.c.l.b16 %v1249
          %v1330 = vunpack.c.l.b16 %v1250
          %v1331 = vunpack.c.l.b16 %v1251
          %v1332 = vunpack.c.l.b16 %v1252
          %v1333 = vunpack.c.l.b16 %v1253
          %v1334 = vunpack.c.l.b16 %v1254
          %v1335 = vunpack.c.l.b16 %v1255
          %v1336 = vunpack.c.l.b16 %v1256
          %v1337 = vunpack.c.l.b16 %v1257
          %v1338 = vunpack.c.l.b16 %v1258
          %v1339 = vunpack.c.l.b16 %v1259
          %v1340 = vunpack.c.l.b16 %v1260
          %v1341 = vunpack.c.l.b16 %v1261
          %v1342 = vunpack.c.l.b16 %v1262
          %v1343 = vunpack.c.l.b16 %v1263
          %v1344 = vunpack.c.l.b16 %v1264
          %v1345 = vunpack.c.l.b16 %v1265
          %v1346 = vunpack.c.l.b16 %v1266
          %v1347 = vunpack.c.l.b16 %v1267
          %v1348 = vunpack.c.l.b16 %v1268
          %v1349 = vunpack.c.l.b16 %v1269
          %v1350 = vunpack.c.l.b16 %v1270
          %v1351 = vunpack.c.l.b16 %v1271
          %v1352 = vunpack.c.l.b16 %v1272
          %v1353 = vunpack.c.l.b16 %v1273
          %v1354 = vpack.c.b16 %v1323, %v1322
          %v1355 = vpack.c.b16 %v1325, %v1324
          %v1356 = vpack.c.b16 %v1327, %v1326
          %v1357 = vpack.c.b16 %v1329, %v1328
          %v1358 = vpack.c.b16 %v1331, %v1330
          %v1359 = vpack.c.b16 %v1333, %v1332
          %v1360 = vpack.c.b16 %v1335, %v1334
          %v1361 = vpack.c.b16 %v1337, %v1336
          %v1362 = vpack.c.b16 %v1339, %v1338
          %v1363 = vpack.c.b16 %v1341, %v1340
          %v1364 = vpack.c.b16 %v1343, %v1342
          %v1365 = vpack.c.b16 %v1345, %v1344
          %v1366 = vpack.c.b16 %v1347, %v1346
          %v1367 = vpack.c.b16 %v1349, %v1348
          %v1368 = vpack.c.b16 %v1351, %v1350
          %v1369 = vpack.c.b16 %v1353, %v1352
          %v1402 = vunpack.c.l.b16 %v1274
          %v1403 = vunpack.c.l.b16 %v1275
          %v1404 = vunpack.c.l.b16 %v1276
          %v1405 = vunpack.c.l.b16 %v1277
          %v1406 = vunpack.c.l.b16 %v1278
          %v1407 = vunpack.c.l.b16 %v1279
          %v1408 = vunpack.c.l.b16 %v1280
          %v1409 = vunpack.c.l.b16 %v1281
          %v1410 = vunpack.c.l.b16 %v1282
          %v1411 = vunpack.c.l.b16 %v1283
          %v1412 = vunpack.c.l.b16 %v1284
          %v1413 = vunpack.c.l.b16 %v1285
          %v1414 = vunpack.c.l.b16 %v1286
          %v1415 = vunpack.c.l.b16 %v1287
          %v1416 = vunpack.c.l.b16 %v1288
          %v1417 = vunpack.c.l.b16 %v1289
          %v1418 = vpack.c.b16 %v1403, %v1402
          %v1419 = vpack.c.b16 %v1405, %v1404
          %v1420 = vpack.c.b16 %v1407, %v1406
          %v1421 = vpack.c.b16 %v1409, %v1408
          %v1422 = vpack.c.b16 %v1411, %v1410
          %v1423 = vpack.c.b16 %v1413, %v1412
          %v1424 = vpack.c.b16 %v1415, %v1414
          %v1425 = vpack.c.b16 %v1417, %v1416
          %1434 = vmatprep.subr.bf16.mxu0 0
          %1435 = vmatpush1.bf16.msra.mxu0 %v1425
          %1436 = vmatprep.subr.bf16.mxu0 0
          %1437 = vmatpush1.bf16.msra.mxu0 %v1424
          %1438 = vmatprep.subr.bf16.mxu0 0
          %1439 = vmatpush1.bf16.msra.mxu0 %v1423
          %1440 = vmatprep.subr.bf16.mxu0 0
          %1441 = vmatpush1.bf16.msra.mxu0 %v1422
          %1442 = vmatprep.subr.bf16.mxu0 0
          %1443 = vmatpush1.bf16.msra.mxu0 %v1421
          %1444 = vmatprep.subr.bf16.mxu0 0
          %1445 = vmatpush1.bf16.msra.mxu0 %v1420
          %1446 = vmatprep.subr.bf16.mxu0 0
          %1447 = vmatpush1.bf16.msra.mxu0 %v1419
          %1448 = vmatprep.subr.bf16.mxu0 0
          %1449 = vmatpush1.bf16.msra.mxu0 %v1418
          %1450 = vmatprep.subr.bf16.mxu0 0
          %1451 = vmatpush2.bf16.msra.mxu0 0
          %1452 = vmatprep.subr.bf16.mxu0 0
          %1453 = vmatpush2.bf16.msra.mxu0 0
          %1454 = vmatprep.subr.bf16.mxu0 0
          %1455 = vmatpush2.bf16.msra.mxu0 0
          %1456 = vmatprep.subr.bf16.mxu0 0
          %1457 = vmatpush2.bf16.msra.mxu0 0
          %1458 = vmatprep.subr.bf16.mxu0 0
          %1459 = vmatpush2.bf16.msra.mxu0 0
          %1460 = vmatprep.subr.bf16.mxu0 0
          %1461 = vmatpush2.bf16.msra.mxu0 0
          %1462 = vmatprep.subr.bf16.mxu0 0
          %1463 = vmatpush2.bf16.msra.mxu0 0
          %1464 = vmatprep.subr.bf16.mxu0 0
          %1465 = vmatpush2.bf16.msra.mxu0 0
          %1466 = vmatprep.mubr.bf16.mxu0 0
          %1467 = vmatmul.mubr.bf16.gmra.mxu0 %v1354
          %v1468 = vpop.f32.mrf.mxu0
          %v1469 = vadd.f32 0.0, %v1468
          %v1470 = vpop.f32.mrf.mxu0
          %v1471 = vpop.f32.mrf.mxu0
          %v1472 = vadd.f32 0.0, %v1471
          %v1473 = vpop.f32.mrf.mxu0
          %1474 = vmatprep.mubr.bf16.mxu0 0
          %1475 = vmatmul.mubr.bf16.gmra.mxu0 %v1355
          %v1476 = vpop.f32.mrf.mxu0
          %v1477 = vadd.f32 0.0, %v1476
          %v1478 = vpop.f32.mrf.mxu0
          %v1479 = vpop.f32.mrf.mxu0
          %v1480 = vadd.f32 0.0, %v1479
          %v1481 = vpop.f32.mrf.mxu0
          %1482 = vmatprep.mubr.bf16.mxu0 0
          %1483 = vmatmul.mubr.bf16.gmra.mxu0 %v1356
          %v1484 = vpop.f32.mrf.mxu0
          %v1485 = vadd.f32 0.0, %v1484
          %v1486 = vpop.f32.mrf.mxu0
          %v1487 = vpop.f32.mrf.mxu0
          %v1488 = vadd.f32 0.0, %v1487
          %v1489 = vpop.f32.mrf.mxu0
          %1490 = vmatprep.mubr.bf16.mxu0 0
          %1491 = vmatmul.mubr.bf16.gmra.mxu0 %v1357
          %v1492 = vpop.f32.mrf.mxu0
          %v1493 = vadd.f32 0.0, %v1492
          %v1494 = vpop.f32.mrf.mxu0
          %v1495 = vpop.f32.mrf.mxu0
          %v1496 = vadd.f32 0.0, %v1495
          %v1497 = vpop.f32.mrf.mxu0
          %1498 = vmatprep.mubr.bf16.mxu0 0
          %1499 = vmatmul.mubr.bf16.gmra.mxu0 %v1358
          %v1500 = vpop.f32.mrf.mxu0
          %v1501 = vadd.f32 0.0, %v1500
          %v1502 = vpop.f32.mrf.mxu0
          %v1503 = vpop.f32.mrf.mxu0
          %v1504 = vadd.f32 0.0, %v1503
          %v1505 = vpop.f32.mrf.mxu0
          %1506 = vmatprep.mubr.bf16.mxu0 0
          %1507 = vmatmul.mubr.bf16.gmra.mxu0 %v1359
          %v1508 = vpop.f32.mrf.mxu0
          %v1509 = vadd.f32 0.0, %v1508
          %v1510 = vpop.f32.mrf.mxu0
          %v1511 = vpop.f32.mrf.mxu0
          %v1512 = vadd.f32 0.0, %v1511
          %v1513 = vpop.f32.mrf.mxu0
          %1514 = vmatprep.mubr.bf16.mxu0 0
          %1515 = vmatmul.mubr.bf16.gmra.mxu0 %v1360
          %v1516 = vpop.f32.mrf.mxu0
          %v1517 = vadd.f32 0.0, %v1516
          %v1518 = vpop.f32.mrf.mxu0
          %v1519 = vpop.f32.mrf.mxu0
          %v1520 = vadd.f32 0.0, %v1519
          %v1521 = vpop.f32.mrf.mxu0
          %1522 = vmatprep.mubr.bf16.mxu0 0
          %1523 = vmatmul.mubr.bf16.gmra.mxu0 %v1361
          %v1524 = vpop.f32.mrf.mxu0
          %v1525 = vadd.f32 0.0, %v1524
          %v1526 = vpop.f32.mrf.mxu0
          %v1527 = vpop.f32.mrf.mxu0
          %v1528 = vadd.f32 0.0, %v1527
          %v1529 = vpop.f32.mrf.mxu0
          %1530 = vmatprep.mubr.bf16.mxu0 0
          %1531 = vmatmul.mubr.bf16.gmra.mxu0 %v1362
          %v1532 = vpop.f32.mrf.mxu0
          %v1533 = vadd.f32 0.0, %v1532
          %v1534 = vpop.f32.mrf.mxu0
          %v1535 = vpop.f32.mrf.mxu0
          %v1536 = vadd.f32 0.0, %v1535
          %v1537 = vpop.f32.mrf.mxu0
          %1538 = vmatprep.mubr.bf16.mxu0 0
          %1539 = vmatmul.mubr.bf16.gmra.mxu0 %v1363
          %v1540 = vpop.f32.mrf.mxu0
          %v1541 = vadd.f32 0.0, %v1540
          %v1542 = vpop.f32.mrf.mxu0
          %v1543 = vpop.f32.mrf.mxu0
          %v1544 = vadd.f32 0.0, %v1543
          %v1545 = vpop.f32.mrf.mxu0
          %1546 = vmatprep.mubr.bf16.mxu0 0
          %1547 = vmatmul.mubr.bf16.gmra.mxu0 %v1364
          %v1548 = vpop.f32.mrf.mxu0
          %v1549 = vadd.f32 0.0, %v1548
          %v1550 = vpop.f32.mrf.mxu0
          %v1551 = vpop.f32.mrf.mxu0
          %v1552 = vadd.f32 0.0, %v1551
          %v1553 = vpop.f32.mrf.mxu0
          %1554 = vmatprep.mubr.bf16.mxu0 0
          %1555 = vmatmul.mubr.bf16.gmra.mxu0 %v1365
          %v1556 = vpop.f32.mrf.mxu0
          %v1557 = vadd.f32 0.0, %v1556
          %v1558 = vpop.f32.mrf.mxu0
          %v1559 = vpop.f32.mrf.mxu0
          %v1560 = vadd.f32 0.0, %v1559
          %v1561 = vpop.f32.mrf.mxu0
          %1562 = vmatprep.mubr.bf16.mxu0 0
          %1563 = vmatmul.mubr.bf16.gmra.mxu0 %v1366
          %v1564 = vpop.f32.mrf.mxu0
          %v1565 = vadd.f32 0.0, %v1564
          %v1566 = vpop.f32.mrf.mxu0
          %v1567 = vpop.f32.mrf.mxu0
          %v1568 = vadd.f32 0.0, %v1567
          %v1569 = vpop.f32.mrf.mxu0
          %1570 = vmatprep.mubr.bf16.mxu0 0
          %1571 = vmatmul.mubr.bf16.gmra.mxu0 %v1367
          %v1572 = vpop.f32.mrf.mxu0
          %v1573 = vadd.f32 0.0, %v1572
          %v1574 = vpop.f32.mrf.mxu0
          %v1575 = vpop.f32.mrf.mxu0
          %v1576 = vadd.f32 0.0, %v1575
          %v1577 = vpop.f32.mrf.mxu0
          %1578 = vmatprep.mubr.bf16.mxu0 0
          %1579 = vmatmul.mubr.bf16.gmra.mxu0 %v1368
          %v1580 = vpop.f32.mrf.mxu0
          %v1581 = vadd.f32 0.0, %v1580
          %v1582 = vpop.f32.mrf.mxu0
          %v1583 = vpop.f32.mrf.mxu0
          %v1584 = vadd.f32 0.0, %v1583
          %v1585 = vpop.f32.mrf.mxu0
          %1586 = vmatprep.mubr.bf16.mxu0 0
          %1587 = vmatmul.mubr.bf16.gmra.mxu0 %v1369
          %v1588 = vpop.f32.mrf.mxu0
          %v1589 = vadd.f32 0.0, %v1588
          %v1590 = vpop.f32.mrf.mxu0
          %v1591 = vpop.f32.mrf.mxu0
          %v1592 = vadd.f32 0.0, %v1591
          %v1593 = vpop.f32.mrf.mxu0
          %1594 = vdwg.mxu0
          %v1611 = vunpack.c.l.b16 %v1226
          %v1612 = vunpack.c.l.b16 %v1227
          %v1613 = vunpack.c.l.b16 %v1228
          %v1614 = vunpack.c.l.b16 %v1229
          %v1615 = vunpack.c.l.b16 %v1230
          %v1616 = vunpack.c.l.b16 %v1231
          %v1617 = vunpack.c.l.b16 %v1232
          %v1618 = vunpack.c.l.b16 %v1233
          %v1619 = vunpack.c.l.b16 %v1234
          %v1620 = vunpack.c.l.b16 %v1235
          %v1621 = vunpack.c.l.b16 %v1236
          %v1622 = vunpack.c.l.b16 %v1237
          %v1623 = vunpack.c.l.b16 %v1238
          %v1624 = vunpack.c.l.b16 %v1239
          %v1625 = vunpack.c.l.b16 %v1240
          %v1626 = vunpack.c.l.b16 %v1241
          %v1627 = vpack.c.b16 %v1612, %v1611
          %v1628 = vpack.c.b16 %v1614, %v1613
          %v1629 = vpack.c.b16 %v1616, %v1615
          %v1630 = vpack.c.b16 %v1618, %v1617
          %v1631 = vpack.c.b16 %v1620, %v1619
          %v1632 = vpack.c.b16 %v1622, %v1621
          %v1633 = vpack.c.b16 %v1624, %v1623
          %v1634 = vpack.c.b16 %v1626, %v1625
          %1643 = vmatprep.subr.bf16.mxu0 0
          %1644 = vmatpush1.bf16.msra.mxu0 %v1634
          %1645 = vmatprep.subr.bf16.mxu0 0
          %1646 = vmatpush1.bf16.msra.mxu0 %v1633
          %1647 = vmatprep.subr.bf16.mxu0 0
          %1648 = vmatpush1.bf16.msra.mxu0 %v1632
          %1649 = vmatprep.subr.bf16.mxu0 0
          %1650 = vmatpush1.bf16.msra.mxu0 %v1631
          %1651 = vmatprep.subr.bf16.mxu0 0
          %1652 = vmatpush1.bf16.msra.mxu0 %v1630
          %1653 = vmatprep.subr.bf16.mxu0 0
          %1654 = vmatpush1.bf16.msra.mxu0 %v1629
          %1655 = vmatprep.subr.bf16.mxu0 0
          %1656 = vmatpush1.bf16.msra.mxu0 %v1628
          %1657 = vmatprep.subr.bf16.mxu0 0
          %1658 = vmatpush1.bf16.msra.mxu0 %v1627
          %1659 = vmatprep.subr.bf16.mxu0 0
          %1660 = vmatpush2.bf16.msra.mxu0 0
          %1661 = vmatprep.subr.bf16.mxu0 0
          %1662 = vmatpush2.bf16.msra.mxu0 0
          %1663 = vmatprep.subr.bf16.mxu0 0
          %1664 = vmatpush2.bf16.msra.mxu0 0
          %1665 = vmatprep.subr.bf16.mxu0 0
          %1666 = vmatpush2.bf16.msra.mxu0 0
          %1667 = vmatprep.subr.bf16.mxu0 0
          %1668 = vmatpush2.bf16.msra.mxu0 0
          %1669 = vmatprep.subr.bf16.mxu0 0
          %1670 = vmatpush2.bf16.msra.mxu0 0
          %1671 = vmatprep.subr.bf16.mxu0 0
          %1672 = vmatpush2.bf16.msra.mxu0 0
          %1673 = vmatprep.subr.bf16.mxu0 0
          %1674 = vmatpush2.bf16.msra.mxu0 0
          %1675 = vmatprep.mubr.bf16.mxu0 0
          %1676 = vmatmul.mubr.bf16.gmra.mxu0 %v1210
          %v1677 = vpop.f32.mrf.mxu0
          %v1678 = vadd.f32 %v1469, %v1677
          %v1679 = vpop.f32.mrf.mxu0
          %v1680 = vpop.f32.mrf.mxu0
          %v1681 = vadd.f32 %v1472, %v1680
          %v1682 = vpop.f32.mrf.mxu0
          %1683 = vmatprep.mubr.bf16.mxu0 0
          %1684 = vmatmul.mubr.bf16.gmra.mxu0 %v1211
          %v1685 = vpop.f32.mrf.mxu0
          %v1686 = vadd.f32 %v1477, %v1685
          %v1687 = vpop.f32.mrf.mxu0
          %v1688 = vpop.f32.mrf.mxu0
          %v1689 = vadd.f32 %v1480, %v1688
          %v1690 = vpop.f32.mrf.mxu0
          %1691 = vmatprep.mubr.bf16.mxu0 0
          %1692 = vmatmul.mubr.bf16.gmra.mxu0 %v1212
          %v1693 = vpop.f32.mrf.mxu0
          %v1694 = vadd.f32 %v1485, %v1693
          %v1695 = vpop.f32.mrf.mxu0
          %v1696 = vpop.f32.mrf.mxu0
          %v1697 = vadd.f32 %v1488, %v1696
          %v1698 = vpop.f32.mrf.mxu0
          %1699 = vmatprep.mubr.bf16.mxu0 0
          %1700 = vmatmul.mubr.bf16.gmra.mxu0 %v1213
          %v1701 = vpop.f32.mrf.mxu0
          %v1702 = vadd.f32 %v1493, %v1701
          %v1703 = vpop.f32.mrf.mxu0
          %v1704 = vpop.f32.mrf.mxu0
          %v1705 = vadd.f32 %v1496, %v1704
          %v1706 = vpop.f32.mrf.mxu0
          %1707 = vmatprep.mubr.bf16.mxu0 0
          %1708 = vmatmul.mubr.bf16.gmra.mxu0 %v1214
          %v1709 = vpop.f32.mrf.mxu0
          %v1710 = vadd.f32 %v1501, %v1709
          %v1711 = vpop.f32.mrf.mxu0
          %v1712 = vpop.f32.mrf.mxu0
          %v1713 = vadd.f32 %v1504, %v1712
          %v1714 = vpop.f32.mrf.mxu0
          %1715 = vmatprep.mubr.bf16.mxu0 0
          %1716 = vmatmul.mubr.bf16.gmra.mxu0 %v1215
          %v1717 = vpop.f32.mrf.mxu0
          %v1718 = vadd.f32 %v1509, %v1717
          %v1719 = vpop.f32.mrf.mxu0
          %v1720 = vpop.f32.mrf.mxu0
          %v1721 = vadd.f32 %v1512, %v1720
          %v1722 = vpop.f32.mrf.mxu0
          %1723 = vmatprep.mubr.bf16.mxu0 0
          %1724 = vmatmul.mubr.bf16.gmra.mxu0 %v1216
          %v1725 = vpop.f32.mrf.mxu0
          %v1726 = vadd.f32 %v1517, %v1725
          %v1727 = vpop.f32.mrf.mxu0
          %v1728 = vpop.f32.mrf.mxu0
          %v1729 = vadd.f32 %v1520, %v1728
          %v1730 = vpop.f32.mrf.mxu0
          %1731 = vmatprep.mubr.bf16.mxu0 0
          %1732 = vmatmul.mubr.bf16.gmra.mxu0 %v1217
          %v1733 = vpop.f32.mrf.mxu0
          %v1734 = vadd.f32 %v1525, %v1733
          %v1735 = vpop.f32.mrf.mxu0
          %v1736 = vpop.f32.mrf.mxu0
          %v1737 = vadd.f32 %v1528, %v1736
          %v1738 = vpop.f32.mrf.mxu0
          %1739 = vmatprep.mubr.bf16.mxu0 0
          %1740 = vmatmul.mubr.bf16.gmra.mxu0 %v1218
          %v1741 = vpop.f32.mrf.mxu0
          %v1742 = vadd.f32 %v1533, %v1741
          %v1743 = vpop.f32.mrf.mxu0
          %v1744 = vpop.f32.mrf.mxu0
          %v1745 = vadd.f32 %v1536, %v1744
          %v1746 = vpop.f32.mrf.mxu0
          %1747 = vmatprep.mubr.bf16.mxu0 0
          %1748 = vmatmul.mubr.bf16.gmra.mxu0 %v1219
          %v1749 = vpop.f32.mrf.mxu0
          %v1750 = vadd.f32 %v1541, %v1749
          %v1751 = vpop.f32.mrf.mxu0
          %v1752 = vpop.f32.mrf.mxu0
          %v1753 = vadd.f32 %v1544, %v1752
          %v1754 = vpop.f32.mrf.mxu0
          %1755 = vmatprep.mubr.bf16.mxu0 0
          %1756 = vmatmul.mubr.bf16.gmra.mxu0 %v1220
          %v1757 = vpop.f32.mrf.mxu0
          %v1758 = vadd.f32 %v1549, %v1757
          %v1759 = vpop.f32.mrf.mxu0
          %v1760 = vpop.f32.mrf.mxu0
          %v1761 = vadd.f32 %v1552, %v1760
          %v1762 = vpop.f32.mrf.mxu0
          %1763 = vmatprep.mubr.bf16.mxu0 0
          %1764 = vmatmul.mubr.bf16.gmra.mxu0 %v1221
          %v1765 = vpop.f32.mrf.mxu0
          %v1766 = vadd.f32 %v1557, %v1765
          %v1767 = vpop.f32.mrf.mxu0
          %v1768 = vpop.f32.mrf.mxu0
          %v1769 = vadd.f32 %v1560, %v1768
          %v1770 = vpop.f32.mrf.mxu0
          %1771 = vmatprep.mubr.bf16.mxu0 0
          %1772 = vmatmul.mubr.bf16.gmra.mxu0 %v1222
          %v1773 = vpop.f32.mrf.mxu0
          %v1774 = vadd.f32 %v1565, %v1773
          %v1775 = vpop.f32.mrf.mxu0
          %v1776 = vpop.f32.mrf.mxu0
          %v1777 = vadd.f32 %v1568, %v1776
          %v1778 = vpop.f32.mrf.mxu0
          %1779 = vmatprep.mubr.bf16.mxu0 0
          %1780 = vmatmul.mubr.bf16.gmra.mxu0 %v1223
          %v1781 = vpop.f32.mrf.mxu0
          %v1782 = vadd.f32 %v1573, %v1781
          %v1783 = vpop.f32.mrf.mxu0
          %v1784 = vpop.f32.mrf.mxu0
          %v1785 = vadd.f32 %v1576, %v1784
          %v1786 = vpop.f32.mrf.mxu0
          %1787 = vmatprep.mubr.bf16.mxu0 0
          %1788 = vmatmul.mubr.bf16.gmra.mxu0 %v1224
          %v1789 = vpop.f32.mrf.mxu0
          %v1790 = vadd.f32 %v1581, %v1789
          %v1791 = vpop.f32.mrf.mxu0
          %v1792 = vpop.f32.mrf.mxu0
          %v1793 = vadd.f32 %v1584, %v1792
          %v1794 = vpop.f32.mrf.mxu0
          %1795 = vmatprep.mubr.bf16.mxu0 0
          %1796 = vmatmul.mubr.bf16.gmra.mxu0 %v1225
          %v1797 = vpop.f32.mrf.mxu0
          %v1798 = vadd.f32 %v1589, %v1797
          %v1799 = vpop.f32.mrf.mxu0
          %v1800 = vpop.f32.mrf.mxu0
          %v1801 = vadd.f32 %v1592, %v1800
          %v1802 = vpop.f32.mrf.mxu0
          %1803 = vdwg.mxu0
          %v1804 = vld [vmem:[%s6] sm:$0x1]
          %v1806 = vlaneseq
          %v1807 = vshrl.u32 %v1806, 7
          %v1808 = vsub.s32 0, %v1807
          %v1809 = vrot.slane %v1804, %v1808
          %v1811 = vadd.f32 %v1678, %v1809
          %v1812 = vadd.f32 %v1681, %v1809
          %v1813 = vadd.f32 %v1686, %v1809
          %v1814 = vadd.f32 %v1689, %v1809
          %v1815 = vadd.f32 %v1694, %v1809
          %v1816 = vadd.f32 %v1697, %v1809
          %v1817 = vadd.f32 %v1702, %v1809
          %v1818 = vadd.f32 %v1705, %v1809
          %v1819 = vadd.f32 %v1710, %v1809
          %v1820 = vadd.f32 %v1713, %v1809
          %v1821 = vadd.f32 %v1718, %v1809
          %v1822 = vadd.f32 %v1721, %v1809
          %v1823 = vadd.f32 %v1726, %v1809
          %v1824 = vadd.f32 %v1729, %v1809
          %v1825 = vadd.f32 %v1734, %v1809
          %v1826 = vadd.f32 %v1737, %v1809
          %v1827 = vadd.f32 %v1742, %v1809
          %v1828 = vadd.f32 %v1745, %v1809
          %v1829 = vadd.f32 %v1750, %v1809
          %v1830 = vadd.f32 %v1753, %v1809
          %v1831 = vadd.f32 %v1758, %v1809
          %v1832 = vadd.f32 %v1761, %v1809
          %v1833 = vadd.f32 %v1766, %v1809
          %v1834 = vadd.f32 %v1769, %v1809
          %v1835 = vadd.f32 %v1774, %v1809
          %v1836 = vadd.f32 %v1777, %v1809
          %v1837 = vadd.f32 %v1782, %v1809
          %v1838 = vadd.f32 %v1785, %v1809
          %v1839 = vadd.f32 %v1790, %v1809
          %v1840 = vadd.f32 %v1793, %v1809
          %v1841 = vadd.f32 %v1798, %v1809
          %v1842 = vadd.f32 %v1801, %v1809
          %v1843 = vmax.f32 %v1811, 0.0
          %v1844 = vmax.f32 %v1812, 0.0
          %v1845 = vmax.f32 %v1813, 0.0
          %v1846 = vmax.f32 %v1814, 0.0
          %v1847 = vmax.f32 %v1815, 0.0
          %v1848 = vmax.f32 %v1816, 0.0
          %v1849 = vmax.f32 %v1817, 0.0
          %v1850 = vmax.f32 %v1818, 0.0
          %v1851 = vmax.f32 %v1819, 0.0
          %v1852 = vmax.f32 %v1820, 0.0
          %v1853 = vmax.f32 %v1821, 0.0
          %v1854 = vmax.f32 %v1822, 0.0
          %v1855 = vmax.f32 %v1823, 0.0
          %v1856 = vmax.f32 %v1824, 0.0
          %v1857 = vmax.f32 %v1825, 0.0
          %v1858 = vmax.f32 %v1826, 0.0
          %v1859 = vmax.f32 %v1827, 0.0
          %v1860 = vmax.f32 %v1828, 0.0
          %v1861 = vmax.f32 %v1829, 0.0
          %v1862 = vmax.f32 %v1830, 0.0
          %v1863 = vmax.f32 %v1831, 0.0
          %v1864 = vmax.f32 %v1832, 0.0
          %v1865 = vmax.f32 %v1833, 0.0
          %v1866 = vmax.f32 %v1834, 0.0
          %v1867 = vmax.f32 %v1835, 0.0
          %v1868 = vmax.f32 %v1836, 0.0
          %v1869 = vmax.f32 %v1837, 0.0
          %v1870 = vmax.f32 %v1838, 0.0
          %v1871 = vmax.f32 %v1839, 0.0
          %v1872 = vmax.f32 %v1840, 0.0
          %v1873 = vmax.f32 %v1841, 0.0
          %v1874 = vmax.f32 %v1842, 0.0
          %v1875 = vpack.c.bf16 %v1844, %v1843
          %v1876 = vpack.c.bf16 %v1846, %v1845
          %v1877 = vpack.c.bf16 %v1848, %v1847
          %v1878 = vpack.c.bf16 %v1850, %v1849
          %v1879 = vpack.c.bf16 %v1852, %v1851
          %v1880 = vpack.c.bf16 %v1854, %v1853
          %v1881 = vpack.c.bf16 %v1856, %v1855
          %v1882 = vpack.c.bf16 %v1858, %v1857
          %v1883 = vpack.c.bf16 %v1860, %v1859
          %v1884 = vpack.c.bf16 %v1862, %v1861
          %v1885 = vpack.c.bf16 %v1864, %v1863
          %v1886 = vpack.c.bf16 %v1866, %v1865
          %v1887 = vpack.c.bf16 %v1868, %v1867
          %v1888 = vpack.c.bf16 %v1870, %v1869
          %v1889 = vpack.c.bf16 %v1872, %v1871
          %v1890 = vpack.c.bf16 %v1874, %v1873
          %v1907 = vunpack.c.l.b16 %v1875
          %v1908 = vunpack.c.h.b16 %v1875
          %v1909 = vunpack.c.l.b16 %v1876
          %v1910 = vunpack.c.h.b16 %v1876
          %v1911 = vunpack.c.l.b16 %v1877
          %v1912 = vunpack.c.h.b16 %v1877
          %v1913 = vunpack.c.l.b16 %v1878
          %v1914 = vunpack.c.h.b16 %v1878
          %v1915 = vunpack.c.l.b16 %v1879
          %v1916 = vunpack.c.h.b16 %v1879
          %v1917 = vunpack.c.l.b16 %v1880
          %v1918 = vunpack.c.h.b16 %v1880
          %v1919 = vunpack.c.l.b16 %v1881
          %v1920 = vunpack.c.h.b16 %v1881
          %v1921 = vunpack.c.l.b16 %v1882
          %v1922 = vunpack.c.h.b16 %v1882
          %v1923 = vunpack.c.l.b16 %v1883
          %v1924 = vunpack.c.h.b16 %v1883
          %v1925 = vunpack.c.l.b16 %v1884
          %v1926 = vunpack.c.h.b16 %v1884
          %v1927 = vunpack.c.l.b16 %v1885
          %v1928 = vunpack.c.h.b16 %v1885
          %v1929 = vunpack.c.l.b16 %v1886
          %v1930 = vunpack.c.h.b16 %v1886
          %v1931 = vunpack.c.l.b16 %v1887
          %v1932 = vunpack.c.h.b16 %v1887
          %v1933 = vunpack.c.l.b16 %v1888
          %v1934 = vunpack.c.h.b16 %v1888
          %v1935 = vunpack.c.l.b16 %v1889
          %v1936 = vunpack.c.h.b16 %v1889
          %v1937 = vunpack.c.l.b16 %v1890
          %v1938 = vunpack.c.h.b16 %v1890
          %v1939 = vpack.c.b16 %v1907, %v1907
          %v1940 = vpack.c.b16 %v1908, %v1908
          %v1941 = vpack.c.b16 %v1909, %v1909
          %v1942 = vpack.c.b16 %v1910, %v1910
          %v1943 = vpack.c.b16 %v1911, %v1911
          %v1944 = vpack.c.b16 %v1912, %v1912
          %v1945 = vpack.c.b16 %v1913, %v1913
          %v1946 = vpack.c.b16 %v1914, %v1914
          %v1947 = vpack.c.b16 %v1915, %v1915
          %v1948 = vpack.c.b16 %v1916, %v1916
          %v1949 = vpack.c.b16 %v1917, %v1917
          %v1950 = vpack.c.b16 %v1918, %v1918
          %v1951 = vpack.c.b16 %v1919, %v1919
          %v1952 = vpack.c.b16 %v1920, %v1920
          %v1953 = vpack.c.b16 %v1921, %v1921
          %v1954 = vpack.c.b16 %v1922, %v1922
          %v1955 = vpack.c.b16 %v1923, %v1923
          %v1956 = vpack.c.b16 %v1924, %v1924
          %v1957 = vpack.c.b16 %v1925, %v1925
          %v1958 = vpack.c.b16 %v1926, %v1926
          %v1959 = vpack.c.b16 %v1927, %v1927
          %v1960 = vpack.c.b16 %v1928, %v1928
          %v1961 = vpack.c.b16 %v1929, %v1929
          %v1962 = vpack.c.b16 %v1930, %v1930
          %v1963 = vpack.c.b16 %v1931, %v1931
          %v1964 = vpack.c.b16 %v1932, %v1932
          %v1965 = vpack.c.b16 %v1933, %v1933
          %v1966 = vpack.c.b16 %v1934, %v1934
          %v1967 = vpack.c.b16 %v1935, %v1935
          %v1968 = vpack.c.b16 %v1936, %v1936
          %v1969 = vpack.c.b16 %v1937, %v1937
          %v1970 = vpack.c.b16 %v1938, %v1938
          %2003 = vst [vmem:[%s468] sm:$0xf] %v1939
          %2004 = vst [vmem:[%s468 + $0x4] sm:$0xf] %v1940
          %2005 = vst [vmem:[%s468 + $0x8] sm:$0xf] %v1941
          %2006 = vst [vmem:[%s468 + $0xc] sm:$0xf] %v1942
          %2007 = vst [vmem:[%s468 + $0x10] sm:$0xf] %v1943
          %2008 = vst [vmem:[%s468 + $0x14] sm:$0xf] %v1944
          %2009 = vst [vmem:[%s468 + $0x18] sm:$0xf] %v1945
          %2010 = vst [vmem:[%s468 + $0x1c] sm:$0xf] %v1946
          %2011 = vst [vmem:[%s468 + $0x20] sm:$0xf] %v1947
          %2012 = vst [vmem:[%s468 + $0x24] sm:$0xf] %v1948
          %2013 = vst [vmem:[%s468 + $0x28] sm:$0xf] %v1949
          %2014 = vst [vmem:[%s468 + $0x2c] sm:$0xf] %v1950
          %2015 = vst [vmem:[%s468 + $0x30] sm:$0xf] %v1951
          %2016 = vst [vmem:[%s468 + $0x34] sm:$0xf] %v1952
          %2017 = vst [vmem:[%s468 + $0x38] sm:$0xf] %v1953
          %2018 = vst [vmem:[%s468 + $0x3c] sm:$0xf] %v1954
          %2019 = vst [vmem:[%s468 + $0x40] sm:$0xf] %v1955
          %2020 = vst [vmem:[%s468 + $0x44] sm:$0xf] %v1956
          %2021 = vst [vmem:[%s468 + $0x48] sm:$0xf] %v1957
          %2022 = vst [vmem:[%s468 + $0x4c] sm:$0xf] %v1958
          %2023 = vst [vmem:[%s468 + $0x50] sm:$0xf] %v1959
          %2024 = vst [vmem:[%s468 + $0x54] sm:$0xf] %v1960
          %2025 = vst [vmem:[%s468 + $0x58] sm:$0xf] %v1961
          %2026 = vst [vmem:[%s468 + $0x5c] sm:$0xf] %v1962
          %2027 = vst [vmem:[%s468 + $0x60] sm:$0xf] %v1963
          %2028 = vst [vmem:[%s468 + $0x64] sm:$0xf] %v1964
          %2029 = vst [vmem:[%s468 + $0x68] sm:$0xf] %v1965
          %2030 = vst [vmem:[%s468 + $0x6c] sm:$0xf] %v1966
          %2031 = vst [vmem:[%s468 + $0x70] sm:$0xf] %v1967
          %2032 = vst [vmem:[%s468 + $0x74] sm:$0xf] %v1968
          %2033 = vst [vmem:[%s468 + $0x78] sm:$0xf] %v1969
          %2034 = vst [vmem:[%s468 + $0x7c] sm:$0xf] %v1970
        $region95: #{tpu_custom_call.1} parent=66 // pred_fallthru
          _
        %s2035 = sand.u32 %s217, 1
        %s2036 = scalar_lea.sflag [#allocation6], %s2035
        %s2037 = sand.u32 %s217, 1
        %s2038 = smul.addr %s2037, 128
        %s2039 = scalar_lea.vmem [#allocation12], %s2038
        // Predicated region
        $region96: #{tpu_custom_call.1} parent=66 // pred_check
          %p2040 = pneg %p227
        $region97: #{tpu_custom_call.1} parent=66 // pred_check_branch
          %2042 = sbr.rel (%p2040) target = $region99
        $region98: #{tpu_custom_call.1} parent=66 // pred_region
          %s2043 = smul.u32 32, %s32
          %s2045 = ssub.s32 2048, 2048
          %2046 = vsyncadd %s2036, %s2045
          %s2047 = smul.addr %s2043, 64
          %s2048 = scalar_lea.hbm %s7, %s2047
          %s2049 = sshll.u32 %s2039, 4
          %s2050 = int_to_ptr.vmem [resolvable:$true] %s2049
          %2055 = dma.vmem_to_hbm [thread:$0]  %s2050, 2048, %s2048, %s2036, 64, 64, 4
        $region99: #{tpu_custom_call.1} parent=66 // pred_fallthru
          _
      $region67: #{tpu_custom_call.1} parent=5 // pred_fallthru
        _
      %p2056 = scmp.le.s32.totalorder 2, %s23
      // Predicated region
      $region100: #{tpu_custom_call.1} parent=5 // pred_check
        %p2057 = pneg %p2056
      $region101: #{tpu_custom_call.1} parent=5 // pred_check_branch
        %2059 = sbr.rel (%p2057) target = $region103
      $region102: #{tpu_custom_call.1} parent=5 // pred_region
        %s2060 = ssub.s32 %s23, 2
        // Predicated region
        $region104: #{tpu_custom_call.1} parent=102 // pred_check
          %p2061 = pneg %p233
        $region105: #{tpu_custom_call.1} parent=102 // pred_check_branch
          %2063 = sbr.rel (%p2061) target = $region107
        $region106: #{tpu_custom_call.1} parent=102 // pred_region
          %s2064 = sand.u32 %s218, 1
          %s2065 = scalar_lea.sflag [#allocation6], %s2064
          %s2066 = sand.u32 %s218, 1
          %s2067 = smul.addr %s2066, 128
          %s2068 = scalar_lea.vmem [#allocation12], %s2067
          %2069 = dma.done %s2065, 2048
        $region107: #{tpu_custom_call.1} parent=102 // pred_fallthru
          _
      $region103: #{tpu_custom_call.1} parent=5 // pred_fallthru
        _
    $region6: #{tpu_custom_call.1} parent=1 // loop_footer
      %s27 = sadd.s32 1, %s23
    $region7: #{tpu_custom_call.1} parent=1 // loop_footer_branch
      %22 = sbr.rel target = $region3
    $region8: #{tpu_custom_call.1} parent=1 // loop_exit
      _
    %2070 = vsyncpa [#allocation5], 1
    %s2071 = scalar_lea.sflag [#allocation5], 1
    %2072 = vsyncpa %s2071, 1
    %2073 = vsyncpa [#allocation8], 1
    %s2074 = scalar_lea.sflag [#allocation8], 1
    %2075 = vsyncpa %s2074, 1
    %2076 = vsyncpa [#allocation11], 1
    %2077 = vsyncpa [#allocation6], 1
    %s2078 = scalar_lea.sflag [#allocation6], 1
    %2079 = vsyncpa %s2078, 1

</llo_original>
